<compile_context>
chip_gen: v6e
topology: v6e:2x2x1
jax: 0.10.0
libtpu: 0.0.40
codegen_flags: <defaults>
</compile_context>

<pallas_src>
import functools

import jax
import jax.numpy as jnp
from jax.experimental import pallas as pl
from jax.experimental.pallas import tpu as pltpu

BN_EPS = 1e-3   # BatchNorm1d(..., eps=0.001)
LANE = 128      # TPU lane width


def _round_up(v, m):
    return (v + m - 1) // m * m


def fused_fc_kernel(num_layers, x_ref, *refs):
    """One grid step = full forward for one episode (one BN batch).

    refs layout: (w_1, gamma_1, beta_1, ..., w_L, gamma_L, beta_L,
                  w_cls, b_cls, out_ref)
      x_ref  : (N, D_in)        bf16
      w_l    : (in_l, out_l)    bf16  (pre-transposed, channel-padded)
      gamma_l: (1, out_l)       f32
      beta_l : (1, out_l)       f32
      w_cls  : (hidden, O_pad)  bf16
      b_cls  : (1, O_pad)       f32
      out    : (N, O_pad)       f32
    """
    o_ref = refs[-1]
    p = refs[:-1]

    h = x_ref[...]                               # (N, D_in) bf16, no f32 copy
    n_rows = h.shape[0]
    inv_n = 1.0 / n_rows

    idx = 0
    for _ in range(num_layers):
        w_ref, g_ref, beta_ref = p[idx], p[idx + 1], p[idx + 2]
        idx += 3

        # Linear (bias dropped: exactly cancelled by BN mean subtraction).
        y = jnp.dot(h, w_ref[...],
                    preferred_element_type=jnp.float32)       # (N, C) f32

        # BatchNorm1d with batch statistics (biased var), one reduction pass.
        # TODO(synk): for N in the hundreds, move these axis-0 sums onto the
        # MXU (ones(1,N) @ y) to keep the XLU free; irrelevant at small N.
        s = jnp.sum(y, axis=0, keepdims=True)                 # (1, C)
        ss = jnp.sum(y * y, axis=0, keepdims=True)            # (1, C)
        mean = s * inv_n
        var = jnp.maximum(ss * inv_n - mean * mean, 0.0)
        scale = g_ref[...] * jax.lax.rsqrt(var + BN_EPS)      # EUP rsqrt
        shift = beta_ref[...] - mean * scale

        # Fused normalize + affine (FMA) + ReLU in f32, then one cast to bf16
        # for the next MXU operand (single cast point, v5e-friendly).
        h = jnp.maximum(y * scale + shift, 0.0).astype(jnp.bfloat16)

    # Classifier head (bias kept), lane-dense padded output store.
    w_cls, b_cls = p[idx], p[idx + 1]
    o_ref[...] = jnp.dot(h, w_cls[...],
                         preferred_element_type=jnp.float32) + b_cls[...]


def prepare_params(layer_params, cls_params):
    """One-time param prep: transpose to (in, out), cast to bf16, pad channels.

    Hidden widths are zero-padded up to a multiple of 128 lanes; padded
    channels stay exactly 0 through BN (+gamma=1, beta=0) and ReLU, and the
    next layer's padded weight rows are 0, so the real outputs are unchanged.
    The classifier output is padded to 128 columns for unmasked lane-dense
    stores; slice back in the wrapper.
    """
    prepped = []
    prev_pad = layer_params[0]["w"].shape[1]                  # input size (unpadded)
    for prm in layer_params:
        out_dim = prm["w"].shape[0]
        out_pad = _round_up(out_dim, LANE)
        w = jnp.transpose(prm["w"]).astype(jnp.bfloat16)      # (in, out)
        w = jnp.pad(w, ((0, prev_pad - w.shape[0]), (0, out_pad - out_dim)))
        gamma = jnp.pad(prm["gamma"].astype(jnp.float32),
                        (0, out_pad - out_dim), constant_values=1.0).reshape(1, -1)
        beta = jnp.pad(prm["beta"].astype(jnp.float32),
                       (0, out_pad - out_dim)).reshape(1, -1)
        prepped.extend([w, gamma, beta])
        prev_pad = out_pad

    cls_w, cls_b = cls_params
    out_size = cls_w.shape[0]
    out_pad = _round_up(out_size, LANE)
    w = jnp.transpose(cls_w).astype(jnp.bfloat16)
    w = jnp.pad(w, ((0, prev_pad - w.shape[0]), (0, out_pad - out_size)))
    b = jnp.pad(cls_b.astype(jnp.float32), (0, out_pad - out_size)).reshape(1, -1)
    prepped.extend([w, b])
    return tuple(jax.device_put(p) for p in prepped)


@functools.partial(jax.jit, static_argnames=("output_size",))
def _forward_prepared(x, params, output_size):
    """x: (E, N, ...) -> (E, N, output_size). Each episode is one BN batch."""
    E, N = x.shape[0], x.shape[1]
    x = x.reshape(E, N, -1).astype(jnp.bfloat16)              # Flatten + bf16 once
    D = x.shape[-1]
    num_layers = (len(params) - 2) // 3
    out_pad = params[-1].shape[-1]

    # Specs: stream x / out per episode; params resident (constant block idx).
    in_specs = [pl.BlockSpec((None, N, D), lambda e: (e, 0, 0))]
    for prm in params:
        r, c = prm.shape
        in_specs.append(pl.BlockSpec((r, c), lambda e: (0, 0)))
    out_spec = pl.BlockSpec((None, N, out_pad), lambda e: (e, 0, 0))

    # Advisory cost estimate (lets XLA schedule/overlap this tiny call).
    flops = 0
    transcendentals = 0
    bytes_accessed = x.size * 2 + E * N * out_pad * 4
    for li in range(num_layers):
        w = params[3 * li]
        flops += 2 * E * N * w.shape[0] * w.shape[1]
        transcendentals += E * w.shape[1]
        bytes_accessed += w.size * 2 + params[3 * li + 1].size * 4 \
            + params[3 * li + 2].size * 4
    w_cls = params[-2]
    flops += 2 * E * N * w_cls.shape[0] * w_cls.shape[1]
    bytes_accessed += w_cls.size * 2 + params[-1].size * 4

    kernel = functools.partial(fused_fc_kernel, num_layers)
    out = pl.pallas_call(
        kernel,
        out_shape=jax.ShapeDtypeStruct((E, N, out_pad), jnp.float32),
        grid_spec=pltpu.PrefetchScalarGridSpec(
            num_scalar_prefetch=0,
            grid=(E,),
            in_specs=in_specs,
            out_specs=out_spec,
        ),
        compiler_params=pltpu.CompilerParams(
            dimension_semantics=("parallel",)),   # v7x: episodes across both TCs
        cost_estimate=pl.CostEstimate(
            flops=flops, transcendentals=transcendentals,
            bytes_accessed=bytes_accessed),
    )(x, *params)
    return out[:, :, :output_size]


def omniglot_fc_forward_episodes(x, params, output_size):
    """Meta-batch entry: x is (E, N, ...); BN stats per episode."""
    return _forward_prepared(x, params, output_size)


def omniglot_fc_forward(x, params, output_size):
    """Exact OmniglotFC.forward semantics: x is ONE BN batch, (N, ...)."""
    return _forward_prepared(x[None], params, output_size)[0]


def init_params(key, input_size, output_size, sizes=None):
    """Deterministic init mirroring the torch module's recipes.

    Linear weights: truncated normal (+/-2 sigma), std=0.01; biases 0.
    BatchNorm1d affine: gamma=1, beta=0 (PyTorch default).
    """
    if sizes is None:
        sizes = [256, 128, 64, 64]
    layer_params = []
    in_dim = input_size
    for s in sizes:
        key, kw = jax.random.split(key)
        w = 0.01 * jax.random.truncated_normal(
            kw, -2.0, 2.0, (s, in_dim), jnp.float32)          # torch (out, in)
        layer_params.append(dict(
            w=w,
            gamma=jnp.ones((s,), jnp.float32),
            beta=jnp.zeros((s,), jnp.float32),
        ))
        in_dim = s
    key, kc = jax.random.split(key)
    cls_w = 0.01 * jax.random.truncated_normal(
        kc, -2.0, 2.0, (output_size, in_dim), jnp.float32)
    cls_b = jnp.zeros((output_size,), jnp.float32)
    return layer_params, (cls_w, cls_b)


if __name__ == "__main__":
    input_size = 28 * 28           # OmniglotFC(input_size=28**2, ...)
    output_size = 5
    sizes = [256, 128, 64, 64]     # default hidden sizes in the spec
    episodes, batch = 4, 8

    key = jax.random.PRNGKey(0)
    key, kx = jax.random.split(key)
    x = jax.random.normal(kx, (episodes, batch, 1, 28, 28), jnp.float32)
    layer_params, cls_params = init_params(key, input_size, output_size, sizes)

    # One-time param prep (transpose / bf16 cast / lane padding).
    params = prepare_params(layer_params, cls_params)

    # Episode-gridded forward: each episode normalized with its own stats.
    out_eps = jax.block_until_ready(
        omniglot_fc_forward_episodes(x, params, output_size))
    assert out_eps.shape == (episodes, batch, output_size), out_eps.shape

    # Single-batch forward = exact nn.Module.forward semantics (E=1 grid).
    out_single = jax.block_until_ready(
        omniglot_fc_forward(x[0], params, output_size))
    assert out_single.shape == (batch, output_size), out_single.shape

    assert bool(jnp.all(jnp.isfinite(out_eps)))
    assert bool(jnp.all(jnp.isfinite(out_single)))
    # Episode 0 of the gridded call must match the single-batch call.
    assert bool(jnp.allclose(out_eps[0], out_single, rtol=1e-3, atol=1e-3))
    print("KERNEL_OK")
</pallas_src>

<mosaic_0001>
module attributes {stable_mosaic.version = 11 : i64} {
  func.func @fused_fc_kernel(%arg0: i32, %arg1: memref<1x8x784xbf16, #tpu.memory_space<vmem>>, %arg2: memref<784x256xbf16, #tpu.memory_space<vmem>>, %arg3: memref<1x256xf32, #tpu.memory_space<vmem>>, %arg4: memref<1x256xf32, #tpu.memory_space<vmem>>, %arg5: memref<256x128xbf16, #tpu.memory_space<vmem>>, %arg6: memref<1x128xf32, #tpu.memory_space<vmem>>, %arg7: memref<1x128xf32, #tpu.memory_space<vmem>>, %arg8: memref<128x128xbf16, #tpu.memory_space<vmem>>, %arg9: memref<1x128xf32, #tpu.memory_space<vmem>>, %arg10: memref<1x128xf32, #tpu.memory_space<vmem>>, %arg11: memref<128x128xbf16, #tpu.memory_space<vmem>>, %arg12: memref<1x128xf32, #tpu.memory_space<vmem>>, %arg13: memref<1x128xf32, #tpu.memory_space<vmem>>, %arg14: memref<128x128xbf16, #tpu.memory_space<vmem>>, %arg15: memref<1x128xf32, #tpu.memory_space<vmem>>, %arg16: memref<1x8x128xf32, #tpu.memory_space<vmem>>) attributes {dimension_semantics = [#tpu.dimension_semantics<parallel>], iteration_bounds = array<i64: 4>, scalar_prefetch = 0 : i64, scratch_operands = 0 : i64, tpu.core_type = #tpu.core_type<tc>, window_params = [{transform_indices = @transform_0, window_bounds = array<i64: 1, 8, 784>}, {pipeline_mode = #tpu.pipeline_mode<synchronous>, transform_indices = @transform_1, window_bounds = array<i64: 784, 256>}, {pipeline_mode = #tpu.pipeline_mode<synchronous>, transform_indices = @transform_2, window_bounds = array<i64: 1, 256>}, {pipeline_mode = #tpu.pipeline_mode<synchronous>, transform_indices = @transform_3, window_bounds = array<i64: 1, 256>}, {pipeline_mode = #tpu.pipeline_mode<synchronous>, transform_indices = @transform_4, window_bounds = array<i64: 256, 128>}, {pipeline_mode = #tpu.pipeline_mode<synchronous>, transform_indices = @transform_5, window_bounds = array<i64: 1, 128>}, {pipeline_mode = #tpu.pipeline_mode<synchronous>, transform_indices = @transform_6, window_bounds = array<i64: 1, 128>}, {pipeline_mode = #tpu.pipeline_mode<synchronous>, transform_indices = @transform_7, window_bounds = array<i64: 128, 128>}, {pipeline_mode = #tpu.pipeline_mode<synchronous>, transform_indices = @transform_8, window_bounds = array<i64: 1, 128>}, {pipeline_mode = #tpu.pipeline_mode<synchronous>, transform_indices = @transform_9, window_bounds = array<i64: 1, 128>}, {pipeline_mode = #tpu.pipeline_mode<synchronous>, transform_indices = @transform_10, window_bounds = array<i64: 128, 128>}, {pipeline_mode = #tpu.pipeline_mode<synchronous>, transform_indices = @transform_11, window_bounds = array<i64: 1, 128>}, {pipeline_mode = #tpu.pipeline_mode<synchronous>, transform_indices = @transform_12, window_bounds = array<i64: 1, 128>}, {pipeline_mode = #tpu.pipeline_mode<synchronous>, transform_indices = @transform_13, window_bounds = array<i64: 128, 128>}, {pipeline_mode = #tpu.pipeline_mode<synchronous>, transform_indices = @transform_14, window_bounds = array<i64: 1, 128>}, {transform_indices = @transform_15, window_bounds = array<i64: 1, 8, 128>}]} {
    %c0 = arith.constant 0 : index
    %c0_0 = arith.constant 0 : index
    %c0_1 = arith.constant 0 : index
    %0 = vector.load %arg1[%c0, %c0_0, %c0_1] : memref<1x8x784xbf16, #tpu.memory_space<vmem>>, vector<1x8x784xbf16>
    %1 = vector.shape_cast %0 : vector<1x8x784xbf16> to vector<8x784xbf16>
    %c0_2 = arith.constant 0 : index
    %c0_3 = arith.constant 0 : index
    %2 = vector.load %arg2[%c0_2, %c0_3] : memref<784x256xbf16, #tpu.memory_space<vmem>>, vector<784x256xbf16>
    %cst = arith.constant dense<0.000000e+00> : vector<8x256xf32>
    %3 = tpu.matmul %1, %2, %cst {dimension_numbers = #tpu.dot_dimension_numbers<[1], [0], [0], [1], [0, 0, 1, 1], [], []>} : vector<8x784xbf16>, vector<784x256xbf16>, vector<8x256xf32> -> vector<8x256xf32>
    %cst_4 = arith.constant dense<0.000000e+00> : vector<256xf32>
    %4 = vector.multi_reduction <add>, %3, %cst_4 [0] : vector<8x256xf32> to vector<256xf32>
    %5 = vector.shape_cast %4 : vector<256xf32> to vector<1x256xf32>
    %6 = arith.mulf %3, %3 : vector<8x256xf32>
    %cst_5 = arith.constant dense<0.000000e+00> : vector<256xf32>
    %7 = vector.multi_reduction <add>, %6, %cst_5 [0] : vector<8x256xf32> to vector<256xf32>
    %8 = vector.shape_cast %7 : vector<256xf32> to vector<1x256xf32>
    %cst_6 = arith.constant 1.250000e-01 : f32
    %9 = vector.broadcast %cst_6 : f32 to vector<1x256xf32>
    %10 = arith.mulf %5, %9 : vector<1x256xf32>
    %cst_7 = arith.constant 1.250000e-01 : f32
    %11 = vector.broadcast %cst_7 : f32 to vector<1x256xf32>
    %12 = arith.mulf %8, %11 : vector<1x256xf32>
    %13 = arith.mulf %10, %10 : vector<1x256xf32>
    %14 = arith.subf %12, %13 : vector<1x256xf32>
    %cst_8 = arith.constant 0.000000e+00 : f32
    %15 = vector.broadcast %cst_8 : f32 to vector<1x256xf32>
    %16 = arith.maximumf %14, %15 : vector<1x256xf32>
    %c0_9 = arith.constant 0 : index
    %c0_10 = arith.constant 0 : index
    %17 = vector.load %arg3[%c0_9, %c0_10] : memref<1x256xf32, #tpu.memory_space<vmem>>, vector<1x256xf32>
    %cst_11 = arith.constant 1.000000e-03 : f32
    %18 = vector.broadcast %cst_11 : f32 to vector<1x256xf32>
    %19 = arith.addf %16, %18 : vector<1x256xf32>
    %20 = math.rsqrt %19 : vector<1x256xf32>
    %21 = arith.mulf %17, %20 : vector<1x256xf32>
    %c0_12 = arith.constant 0 : index
    %c0_13 = arith.constant 0 : index
    %22 = vector.load %arg4[%c0_12, %c0_13] : memref<1x256xf32, #tpu.memory_space<vmem>>, vector<1x256xf32>
    %23 = arith.mulf %10, %21 : vector<1x256xf32>
    %24 = arith.subf %22, %23 : vector<1x256xf32>
    %25 = vector.broadcast %21 : vector<1x256xf32> to vector<8x256xf32>
    %26 = arith.mulf %3, %25 : vector<8x256xf32>
    %27 = vector.broadcast %24 : vector<1x256xf32> to vector<8x256xf32>
    %28 = arith.addf %26, %27 : vector<8x256xf32>
    %cst_14 = arith.constant 0.000000e+00 : f32
    %29 = vector.broadcast %cst_14 : f32 to vector<8x256xf32>
    %30 = arith.maximumf %28, %29 : vector<8x256xf32>
    %31 = arith.truncf %30 : vector<8x256xf32> to vector<8x256xbf16>
    %c0_15 = arith.constant 0 : index
    %c0_16 = arith.constant 0 : index
    %32 = vector.load %arg5[%c0_15, %c0_16] : memref<256x128xbf16, #tpu.memory_space<vmem>>, vector<256x128xbf16>
    %cst_17 = arith.constant dense<0.000000e+00> : vector<8x128xf32>
    %33 = tpu.matmul %31, %32, %cst_17 {dimension_numbers = #tpu.dot_dimension_numbers<[1], [0], [0], [1], [0, 0, 1, 1], [], []>} : vector<8x256xbf16>, vector<256x128xbf16>, vector<8x128xf32> -> vector<8x128xf32>
    %cst_18 = arith.constant dense<0.000000e+00> : vector<128xf32>
    %34 = vector.multi_reduction <add>, %33, %cst_18 [0] : vector<8x128xf32> to vector<128xf32>
    %35 = vector.shape_cast %34 : vector<128xf32> to vector<1x128xf32>
    %36 = arith.mulf %33, %33 : vector<8x128xf32>
    %cst_19 = arith.constant dense<0.000000e+00> : vector<128xf32>
    %37 = vector.multi_reduction <add>, %36, %cst_19 [0] : vector<8x128xf32> to vector<128xf32>
    %38 = vector.shape_cast %37 : vector<128xf32> to vector<1x128xf32>
    %cst_20 = arith.constant 1.250000e-01 : f32
    %39 = vector.broadcast %cst_20 : f32 to vector<1x128xf32>
    %40 = arith.mulf %35, %39 : vector<1x128xf32>
    %cst_21 = arith.constant 1.250000e-01 : f32
    %41 = vector.broadcast %cst_21 : f32 to vector<1x128xf32>
    %42 = arith.mulf %38, %41 : vector<1x128xf32>
    %43 = arith.mulf %40, %40 : vector<1x128xf32>
    %44 = arith.subf %42, %43 : vector<1x128xf32>
    %cst_22 = arith.constant 0.000000e+00 : f32
    %45 = vector.broadcast %cst_22 : f32 to vector<1x128xf32>
    %46 = arith.maximumf %44, %45 : vector<1x128xf32>
    %c0_23 = arith.constant 0 : index
    %c0_24 = arith.constant 0 : index
    %47 = vector.load %arg6[%c0_23, %c0_24] : memref<1x128xf32, #tpu.memory_space<vmem>>, vector<1x128xf32>
    %cst_25 = arith.constant 1.000000e-03 : f32
    %48 = vector.broadcast %cst_25 : f32 to vector<1x128xf32>
    %49 = arith.addf %46, %48 : vector<1x128xf32>
    %50 = math.rsqrt %49 : vector<1x128xf32>
    %51 = arith.mulf %47, %50 : vector<1x128xf32>
    %c0_26 = arith.constant 0 : index
    %c0_27 = arith.constant 0 : index
    %52 = vector.load %arg7[%c0_26, %c0_27] : memref<1x128xf32, #tpu.memory_space<vmem>>, vector<1x128xf32>
    %53 = arith.mulf %40, %51 : vector<1x128xf32>
    %54 = arith.subf %52, %53 : vector<1x128xf32>
    %55 = vector.broadcast %51 : vector<1x128xf32> to vector<8x128xf32>
    %56 = arith.mulf %33, %55 : vector<8x128xf32>
    %57 = vector.broadcast %54 : vector<1x128xf32> to vector<8x128xf32>
    %58 = arith.addf %56, %57 : vector<8x128xf32>
    %cst_28 = arith.constant 0.000000e+00 : f32
    %59 = vector.broadcast %cst_28 : f32 to vector<8x128xf32>
    %60 = arith.maximumf %58, %59 : vector<8x128xf32>
    %61 = arith.truncf %60 : vector<8x128xf32> to vector<8x128xbf16>
    %c0_29 = arith.constant 0 : index
    %c0_30 = arith.constant 0 : index
    %62 = vector.load %arg8[%c0_29, %c0_30] : memref<128x128xbf16, #tpu.memory_space<vmem>>, vector<128x128xbf16>
    %cst_31 = arith.constant dense<0.000000e+00> : vector<8x128xf32>
    %63 = tpu.matmul %61, %62, %cst_31 {dimension_numbers = #tpu.dot_dimension_numbers<[1], [0], [0], [1], [0, 0, 1, 1], [], []>} : vector<8x128xbf16>, vector<128x128xbf16>, vector<8x128xf32> -> vector<8x128xf32>
    %cst_32 = arith.constant dense<0.000000e+00> : vector<128xf32>
    %64 = vector.multi_reduction <add>, %63, %cst_32 [0] : vector<8x128xf32> to vector<128xf32>
    %65 = vector.shape_cast %64 : vector<128xf32> to vector<1x128xf32>
    %66 = arith.mulf %63, %63 : vector<8x128xf32>
    %cst_33 = arith.constant dense<0.000000e+00> : vector<128xf32>
    %67 = vector.multi_reduction <add>, %66, %cst_33 [0] : vector<8x128xf32> to vector<128xf32>
    %68 = vector.shape_cast %67 : vector<128xf32> to vector<1x128xf32>
    %cst_34 = arith.constant 1.250000e-01 : f32
    %69 = vector.broadcast %cst_34 : f32 to vector<1x128xf32>
    %70 = arith.mulf %65, %69 : vector<1x128xf32>
    %cst_35 = arith.constant 1.250000e-01 : f32
    %71 = vector.broadcast %cst_35 : f32 to vector<1x128xf32>
    %72 = arith.mulf %68, %71 : vector<1x128xf32>
    %73 = arith.mulf %70, %70 : vector<1x128xf32>
    %74 = arith.subf %72, %73 : vector<1x128xf32>
    %cst_36 = arith.constant 0.000000e+00 : f32
    %75 = vector.broadcast %cst_36 : f32 to vector<1x128xf32>
    %76 = arith.maximumf %74, %75 : vector<1x128xf32>
    %c0_37 = arith.constant 0 : index
    %c0_38 = arith.constant 0 : index
    %77 = vector.load %arg9[%c0_37, %c0_38] : memref<1x128xf32, #tpu.memory_space<vmem>>, vector<1x128xf32>
    %cst_39 = arith.constant 1.000000e-03 : f32
    %78 = vector.broadcast %cst_39 : f32 to vector<1x128xf32>
    %79 = arith.addf %76, %78 : vector<1x128xf32>
    %80 = math.rsqrt %79 : vector<1x128xf32>
    %81 = arith.mulf %77, %80 : vector<1x128xf32>
    %c0_40 = arith.constant 0 : index
    %c0_41 = arith.constant 0 : index
    %82 = vector.load %arg10[%c0_40, %c0_41] : memref<1x128xf32, #tpu.memory_space<vmem>>, vector<1x128xf32>
    %83 = arith.mulf %70, %81 : vector<1x128xf32>
    %84 = arith.subf %82, %83 : vector<1x128xf32>
    %85 = vector.broadcast %81 : vector<1x128xf32> to vector<8x128xf32>
    %86 = arith.mulf %63, %85 : vector<8x128xf32>
    %87 = vector.broadcast %84 : vector<1x128xf32> to vector<8x128xf32>
    %88 = arith.addf %86, %87 : vector<8x128xf32>
    %cst_42 = arith.constant 0.000000e+00 : f32
    %89 = vector.broadcast %cst_42 : f32 to vector<8x128xf32>
    %90 = arith.maximumf %88, %89 : vector<8x128xf32>
    %91 = arith.truncf %90 : vector<8x128xf32> to vector<8x128xbf16>
    %c0_43 = arith.constant 0 : index
    %c0_44 = arith.constant 0 : index
    %92 = vector.load %arg11[%c0_43, %c0_44] : memref<128x128xbf16, #tpu.memory_space<vmem>>, vector<128x128xbf16>
    %cst_45 = arith.constant dense<0.000000e+00> : vector<8x128xf32>
    %93 = tpu.matmul %91, %92, %cst_45 {dimension_numbers = #tpu.dot_dimension_numbers<[1], [0], [0], [1], [0, 0, 1, 1], [], []>} : vector<8x128xbf16>, vector<128x128xbf16>, vector<8x128xf32> -> vector<8x128xf32>
    %cst_46 = arith.constant dense<0.000000e+00> : vector<128xf32>
    %94 = vector.multi_reduction <add>, %93, %cst_46 [0] : vector<8x128xf32> to vector<128xf32>
    %95 = vector.shape_cast %94 : vector<128xf32> to vector<1x128xf32>
    %96 = arith.mulf %93, %93 : vector<8x128xf32>
    %cst_47 = arith.constant dense<0.000000e+00> : vector<128xf32>
    %97 = vector.multi_reduction <add>, %96, %cst_47 [0] : vector<8x128xf32> to vector<128xf32>
    %98 = vector.shape_cast %97 : vector<128xf32> to vector<1x128xf32>
    %cst_48 = arith.constant 1.250000e-01 : f32
    %99 = vector.broadcast %cst_48 : f32 to vector<1x128xf32>
    %100 = arith.mulf %95, %99 : vector<1x128xf32>
    %cst_49 = arith.constant 1.250000e-01 : f32
    %101 = vector.broadcast %cst_49 : f32 to vector<1x128xf32>
    %102 = arith.mulf %98, %101 : vector<1x128xf32>
    %103 = arith.mulf %100, %100 : vector<1x128xf32>
    %104 = arith.subf %102, %103 : vector<1x128xf32>
    %cst_50 = arith.constant 0.000000e+00 : f32
    %105 = vector.broadcast %cst_50 : f32 to vector<1x128xf32>
    %106 = arith.maximumf %104, %105 : vector<1x128xf32>
    %c0_51 = arith.constant 0 : index
    %c0_52 = arith.constant 0 : index
    %107 = vector.load %arg12[%c0_51, %c0_52] : memref<1x128xf32, #tpu.memory_space<vmem>>, vector<1x128xf32>
    %cst_53 = arith.constant 1.000000e-03 : f32
    %108 = vector.broadcast %cst_53 : f32 to vector<1x128xf32>
    %109 = arith.addf %106, %108 : vector<1x128xf32>
    %110 = math.rsqrt %109 : vector<1x128xf32>
    %111 = arith.mulf %107, %110 : vector<1x128xf32>
    %c0_54 = arith.constant 0 : index
    %c0_55 = arith.constant 0 : index
    %112 = vector.load %arg13[%c0_54, %c0_55] : memref<1x128xf32, #tpu.memory_space<vmem>>, vector<1x128xf32>
    %113 = arith.mulf %100, %111 : vector<1x128xf32>
    %114 = arith.subf %112, %113 : vector<1x128xf32>
    %115 = vector.broadcast %111 : vector<1x128xf32> to vector<8x128xf32>
    %116 = arith.mulf %93, %115 : vector<8x128xf32>
    %117 = vector.broadcast %114 : vector<1x128xf32> to vector<8x128xf32>
    %118 = arith.addf %116, %117 : vector<8x128xf32>
    %cst_56 = arith.constant 0.000000e+00 : f32
    %119 = vector.broadcast %cst_56 : f32 to vector<8x128xf32>
    %120 = arith.maximumf %118, %119 : vector<8x128xf32>
    %121 = arith.truncf %120 : vector<8x128xf32> to vector<8x128xbf16>
    %c0_57 = arith.constant 0 : index
    %c0_58 = arith.constant 0 : index
    %122 = vector.load %arg14[%c0_57, %c0_58] : memref<128x128xbf16, #tpu.memory_space<vmem>>, vector<128x128xbf16>
    %cst_59 = arith.constant dense<0.000000e+00> : vector<8x128xf32>
    %123 = tpu.matmul %121, %122, %cst_59 {dimension_numbers = #tpu.dot_dimension_numbers<[1], [0], [0], [1], [0, 0, 1, 1], [], []>} : vector<8x128xbf16>, vector<128x128xbf16>, vector<8x128xf32> -> vector<8x128xf32>
    %c0_60 = arith.constant 0 : index
    %c0_61 = arith.constant 0 : index
    %124 = vector.load %arg15[%c0_60, %c0_61] : memref<1x128xf32, #tpu.memory_space<vmem>>, vector<1x128xf32>
    %125 = vector.broadcast %124 : vector<1x128xf32> to vector<8x128xf32>
    %126 = arith.addf %123, %125 : vector<8x128xf32>
    %c0_62 = arith.constant 0 : index
    %c0_63 = arith.constant 0 : index
    %c0_64 = arith.constant 0 : index
    %127 = vector.load %arg16[%c0_62, %c0_63, %c0_64] : memref<1x8x128xf32, #tpu.memory_space<vmem>>, vector<1x8x128xf32>
    %128 = vector.shape_cast %127 : vector<1x8x128xf32> to vector<8x128xf32>
    %129 = vector.shape_cast %126 : vector<8x128xf32> to vector<1x8x128xf32>
    tpu.vector_store %arg16[%c0_62, %c0_63, %c0_64], %129 {strides = array<i32>} : memref<1x8x128xf32, #tpu.memory_space<vmem>>, vector<1x8x128xf32>,
    return
  }
  func.func @transform_0(%arg0: i32) -> (i32, i32, i32) {
    %c0_i32 = arith.constant 0 : i32
    %c0_i32_0 = arith.constant 0 : i32
    %c0_i32_1 = arith.constant 0 : i32
    return %arg0, %c0_i32, %c0_i32_0 : i32, i32, i32
  }
  func.func @transform_1(%arg0: i32) -> (i32, i32) {
    %c0_i32 = arith.constant 0 : i32
    %c0_i32_0 = arith.constant 0 : i32
    %c0_i32_1 = arith.constant 0 : i32
    return %c0_i32, %c0_i32_0 : i32, i32
  }
  func.func @transform_2(%arg0: i32) -> (i32, i32) {
    %c0_i32 = arith.constant 0 : i32
    %c0_i32_0 = arith.constant 0 : i32
    %c0_i32_1 = arith.constant 0 : i32
    return %c0_i32, %c0_i32_0 : i32, i32
  }
  func.func @transform_3(%arg0: i32) -> (i32, i32) {
    %c0_i32 = arith.constant 0 : i32
    %c0_i32_0 = arith.constant 0 : i32
    %c0_i32_1 = arith.constant 0 : i32
    return %c0_i32, %c0_i32_0 : i32, i32
  }
  func.func @transform_4(%arg0: i32) -> (i32, i32) {
    %c0_i32 = arith.constant 0 : i32
    %c0_i32_0 = arith.constant 0 : i32
    %c0_i32_1 = arith.constant 0 : i32
    return %c0_i32, %c0_i32_0 : i32, i32
  }
  func.func @transform_5(%arg0: i32) -> (i32, i32) {
    %c0_i32 = arith.constant 0 : i32
    %c0_i32_0 = arith.constant 0 : i32
    %c0_i32_1 = arith.constant 0 : i32
    return %c0_i32, %c0_i32_0 : i32, i32
  }
  func.func @transform_6(%arg0: i32) -> (i32, i32) {
    %c0_i32 = arith.constant 0 : i32
    %c0_i32_0 = arith.constant 0 : i32
    %c0_i32_1 = arith.constant 0 : i32
    return %c0_i32, %c0_i32_0 : i32, i32
  }
  func.func @transform_7(%arg0: i32) -> (i32, i32) {
    %c0_i32 = arith.constant 0 : i32
    %c0_i32_0 = arith.constant 0 : i32
    %c0_i32_1 = arith.constant 0 : i32
    return %c0_i32, %c0_i32_0 : i32, i32
  }
  func.func @transform_8(%arg0: i32) -> (i32, i32) {
    %c0_i32 = arith.constant 0 : i32
    %c0_i32_0 = arith.constant 0 : i32
    %c0_i32_1 = arith.constant 0 : i32
    return %c0_i32, %c0_i32_0 : i32, i32
  }
  func.func @transform_9(%arg0: i32) -> (i32, i32) {
    %c0_i32 = arith.constant 0 : i32
    %c0_i32_0 = arith.constant 0 : i32
    %c0_i32_1 = arith.constant 0 : i32
    return %c0_i32, %c0_i32_0 : i32, i32
  }
  func.func @transform_10(%arg0: i32) -> (i32, i32) {
    %c0_i32 = arith.constant 0 : i32
    %c0_i32_0 = arith.constant 0 : i32
    %c0_i32_1 = arith.constant 0 : i32
    return %c0_i32, %c0_i32_0 : i32, i32
  }
  func.func @transform_11(%arg0: i32) -> (i32, i32) {
    %c0_i32 = arith.constant 0 : i32
    %c0_i32_0 = arith.constant 0 : i32
    %c0_i32_1 = arith.constant 0 : i32
    return %c0_i32, %c0_i32_0 : i32, i32
  }
  func.func @transform_12(%arg0: i32) -> (i32, i32) {
    %c0_i32 = arith.constant 0 : i32
    %c0_i32_0 = arith.constant 0 : i32
    %c0_i32_1 = arith.constant 0 : i32
    return %c0_i32, %c0_i32_0 : i32, i32
  }
  func.func @transform_13(%arg0: i32) -> (i32, i32) {
    %c0_i32 = arith.constant 0 : i32
    %c0_i32_0 = arith.constant 0 : i32
    %c0_i32_1 = arith.constant 0 : i32
    return %c0_i32, %c0_i32_0 : i32, i32
  }
  func.func @transform_14(%arg0: i32) -> (i32, i32) {
    %c0_i32 = arith.constant 0 : i32
    %c0_i32_0 = arith.constant 0 : i32
    %c0_i32_1 = arith.constant 0 : i32
    return %c0_i32, %c0_i32_0 : i32, i32
  }
  func.func @transform_15(%arg0: i32) -> (i32, i32, i32) {
    %c0_i32 = arith.constant 0 : i32
    %c0_i32_0 = arith.constant 0 : i32
    %c0_i32_1 = arith.constant 0 : i32
    return %arg0, %c0_i32, %c0_i32_0 : i32, i32, i32
  }
}

</mosaic_0001>

<llo_original>
// kernel: _forward_prepared.1
$region0: #{_forward_prepared.1}
  #allocation0 [shape = 'u32[]', space=smem, size = 0x4, offset = 0x4, fixed_abs, tag = 'smem constant byte address 0x4 - core index']
  #allocation1 [shape = 'u32[144,128]{1,0:T(1,128)}', space=vmem, size = 0x12000, scoped, tag = 'internal scratch']
  %s0 = inlined_call_operand.vmem [shape: bf16[4,8,784], index: 0, kind: input, shape index: {}]
  %s1 = inlined_call_operand.vmem [shape: bf16[784,256], index: 1, kind: input, shape index: {}]
  %s2 = inlined_call_operand.vmem [shape: f32[1,256], index: 2, kind: input, shape index: {}]
  %s3 = inlined_call_operand.vmem [shape: f32[1,256], index: 3, kind: input, shape index: {}]
  %s4 = inlined_call_operand.vmem [shape: bf16[256,128], index: 4, kind: input, shape index: {}]
  %s5 = inlined_call_operand.vmem [shape: f32[1,128], index: 5, kind: input, shape index: {}]
  %s6 = inlined_call_operand.vmem [shape: f32[1,128], index: 6, kind: input, shape index: {}]
  %s7 = inlined_call_operand.vmem [shape: bf16[128,128], index: 7, kind: input, shape index: {}]
  %s8 = inlined_call_operand.vmem [shape: f32[1,128], index: 8, kind: input, shape index: {}]
  %s9 = inlined_call_operand.vmem [shape: f32[1,128], index: 9, kind: input, shape index: {}]
  %s10 = inlined_call_operand.vmem [shape: bf16[128,128], index: 10, kind: input, shape index: {}]
  %s11 = inlined_call_operand.vmem [shape: f32[1,128], index: 11, kind: input, shape index: {}]
  %s12 = inlined_call_operand.vmem [shape: f32[1,128], index: 12, kind: input, shape index: {}]
  %s13 = inlined_call_operand.vmem [shape: bf16[128,128], index: 13, kind: input, shape index: {}]
  %s14 = inlined_call_operand.vmem [shape: f32[1,128], index: 14, kind: input, shape index: {}]
  %s15 = inlined_call_operand.vmem [shape: f32[4,8,128], index: 15, kind: output, shape index: {}]
  %s16 = sld [smem:[#allocation0]]
  $region93: #{_forward_prepared.1} parent=0
    _
  %s18 = ssub.s32 1, %s16
  %s19 = scalar_select 0, %s18, %s16
  loop: start=0, step=1, limit=6
  $region2: #{_forward_prepared.1} parent=0 // loop_pre_header
    _
  $region3: #{_forward_prepared.1} parent=0 // loop_header
    %s21 = sphi 0, %s25
    %p22 = scmp.ge.s32.totalorder %s21, 6
    %s31 = sphi 0, %s33
    %s34 = sphi 0, %s31
    %s35 = sphi 0, %s34
    %s51 = sphi 0, %s35
    %s55 = sphi 0, %s55
    %s57 = sphi 0, %s55
    %s58 = sphi 0, %s57
    %s72 = sphi 0, %s58
    %s76 = sphi 0, %s76
    %s78 = sphi 0, %s76
    %s79 = sphi 0, %s78
    %s93 = sphi 0, %s79
    %s97 = sphi 0, %s97
    %s99 = sphi 0, %s97
    %s100 = sphi 0, %s99
    %s114 = sphi 0, %s100
    %s118 = sphi 0, %s118
    %s120 = sphi 0, %s118
    %s121 = sphi 0, %s120
    %s135 = sphi 0, %s121
    %s139 = sphi 0, %s139
    %s141 = sphi 0, %s139
    %s142 = sphi 0, %s141
    %s156 = sphi 0, %s142
    %s160 = sphi 0, %s160
    %s162 = sphi 0, %s160
    %s163 = sphi 0, %s162
    %s177 = sphi 0, %s163
    %s181 = sphi 0, %s181
    %s183 = sphi 0, %s181
    %s184 = sphi 0, %s183
    %s198 = sphi 0, %s184
    %s202 = sphi 0, %s202
    %s204 = sphi 0, %s202
    %s205 = sphi 0, %s204
    %s219 = sphi 0, %s205
    %s223 = sphi 0, %s223
    %s225 = sphi 0, %s223
    %s226 = sphi 0, %s225
    %s240 = sphi 0, %s226
    %s244 = sphi 0, %s244
    %s246 = sphi 0, %s244
    %s247 = sphi 0, %s246
    %s261 = sphi 0, %s247
    %s265 = sphi 0, %s265
    %s267 = sphi 0, %s265
    %s268 = sphi 0, %s267
    %s282 = sphi 0, %s268
    %s286 = sphi 0, %s286
    %s288 = sphi 0, %s286
    %s289 = sphi 0, %s288
    %s303 = sphi 0, %s289
    %s307 = sphi 0, %s307
    %s309 = sphi 0, %s307
    %s310 = sphi 0, %s309
    %s324 = sphi 0, %s310
    %s328 = sphi 0, %s328
    %s330 = sphi 0, %s328
    %s331 = sphi 0, %s330
    %s345 = sphi 0, %s331
    %s351 = sphi 0, %s353
    %s354 = sphi 0, %s351
    %s355 = sphi 0, %s354
    %s371 = sphi 0, %s355
  $region4: #{_forward_prepared.1} parent=0 // loop_header_branch
    %24 = sbr.rel (%p22) target = $region8
  $region5: #{_forward_prepared.1} parent=0 // loop_body
    %s26 = ssub.s32 %s21, 1
    %s27 = ssub.s32 %s21, 2
    %s28 = sadd.s32 %s21, 1
    %s29 = ssub.s32 %s21, %s28
    %p30 = scmp.eq.s32.totalorder %s29, 0
    %s32 = sadd.s32 %s31, 1
    %s33 = scalar_select %p30, %s31, %s32
    %p36 = pneg %p30
    %p37 = scmp.eq.s32.totalorder %s21, 3
    %p38 = por %p36, %p37
    %p39 = scmp.ne.s32.totalorder %s31, %s34
    %p40 = scmp.eq.s32.totalorder %s21, 0
    %p41 = por %p39, %p40
    %p42 = scmp.ne.s32.totalorder %s31, %s34
    %p43 = scmp.eq.s32.totalorder %s26, 3
    %p44 = por %p42, %p43
    %p45 = scmp.ne.s32.totalorder %s34, %s35
    %p46 = scmp.eq.s32.totalorder %s26, 0
    %p47 = por %p45, %p46
    %p48 = scmp.ne.s32.totalorder %s34, %s35
    %p49 = scmp.eq.s32.totalorder %s27, 3
    %p50 = por %p48, %p49
    %p52 = scmp.ne.s32.totalorder %s35, %s51
    %p53 = scmp.eq.s32.totalorder %s27, 0
    %p54 = por %p52, %p53
    %s56 = sadd.s32 %s55, 1
    %p59 = scmp.eq.s32.totalorder %s21, 3
    %p60 = scmp.ne.s32.totalorder %s55, %s57
    %p61 = scmp.eq.s32.totalorder %s21, 0
    %p62 = por %p60, %p61
    %p63 = scmp.ne.s32.totalorder %s55, %s57
    %p64 = scmp.eq.s32.totalorder %s26, 3
    %p65 = por %p63, %p64
    %p66 = scmp.ne.s32.totalorder %s57, %s58
    %p67 = scmp.eq.s32.totalorder %s26, 0
    %p68 = por %p66, %p67
    %p69 = scmp.ne.s32.totalorder %s57, %s58
    %p70 = scmp.eq.s32.totalorder %s27, 3
    %p71 = por %p69, %p70
    %p73 = scmp.ne.s32.totalorder %s58, %s72
    %p74 = scmp.eq.s32.totalorder %s27, 0
    %p75 = por %p73, %p74
    %s77 = sadd.s32 %s76, 1
    %p80 = scmp.eq.s32.totalorder %s21, 3
    %p81 = scmp.ne.s32.totalorder %s76, %s78
    %p82 = scmp.eq.s32.totalorder %s21, 0
    %p83 = por %p81, %p82
    %p84 = scmp.ne.s32.totalorder %s76, %s78
    %p85 = scmp.eq.s32.totalorder %s26, 3
    %p86 = por %p84, %p85
    %p87 = scmp.ne.s32.totalorder %s78, %s79
    %p88 = scmp.eq.s32.totalorder %s26, 0
    %p89 = por %p87, %p88
    %p90 = scmp.ne.s32.totalorder %s78, %s79
    %p91 = scmp.eq.s32.totalorder %s27, 3
    %p92 = por %p90, %p91
    %p94 = scmp.ne.s32.totalorder %s79, %s93
    %p95 = scmp.eq.s32.totalorder %s27, 0
    %p96 = por %p94, %p95
    %s98 = sadd.s32 %s97, 1
    %p101 = scmp.eq.s32.totalorder %s21, 3
    %p102 = scmp.ne.s32.totalorder %s97, %s99
    %p103 = scmp.eq.s32.totalorder %s21, 0
    %p104 = por %p102, %p103
    %p105 = scmp.ne.s32.totalorder %s97, %s99
    %p106 = scmp.eq.s32.totalorder %s26, 3
    %p107 = por %p105, %p106
    %p108 = scmp.ne.s32.totalorder %s99, %s100
    %p109 = scmp.eq.s32.totalorder %s26, 0
    %p110 = por %p108, %p109
    %p111 = scmp.ne.s32.totalorder %s99, %s100
    %p112 = scmp.eq.s32.totalorder %s27, 3
    %p113 = por %p111, %p112
    %p115 = scmp.ne.s32.totalorder %s100, %s114
    %p116 = scmp.eq.s32.totalorder %s27, 0
    %p117 = por %p115, %p116
    %s119 = sadd.s32 %s118, 1
    %p122 = scmp.eq.s32.totalorder %s21, 3
    %p123 = scmp.ne.s32.totalorder %s118, %s120
    %p124 = scmp.eq.s32.totalorder %s21, 0
    %p125 = por %p123, %p124
    %p126 = scmp.ne.s32.totalorder %s118, %s120
    %p127 = scmp.eq.s32.totalorder %s26, 3
    %p128 = por %p126, %p127
    %p129 = scmp.ne.s32.totalorder %s120, %s121
    %p130 = scmp.eq.s32.totalorder %s26, 0
    %p131 = por %p129, %p130
    %p132 = scmp.ne.s32.totalorder %s120, %s121
    %p133 = scmp.eq.s32.totalorder %s27, 3
    %p134 = por %p132, %p133
    %p136 = scmp.ne.s32.totalorder %s121, %s135
    %p137 = scmp.eq.s32.totalorder %s27, 0
    %p138 = por %p136, %p137
    %s140 = sadd.s32 %s139, 1
    %p143 = scmp.eq.s32.totalorder %s21, 3
    %p144 = scmp.ne.s32.totalorder %s139, %s141
    %p145 = scmp.eq.s32.totalorder %s21, 0
    %p146 = por %p144, %p145
    %p147 = scmp.ne.s32.totalorder %s139, %s141
    %p148 = scmp.eq.s32.totalorder %s26, 3
    %p149 = por %p147, %p148
    %p150 = scmp.ne.s32.totalorder %s141, %s142
    %p151 = scmp.eq.s32.totalorder %s26, 0
    %p152 = por %p150, %p151
    %p153 = scmp.ne.s32.totalorder %s141, %s142
    %p154 = scmp.eq.s32.totalorder %s27, 3
    %p155 = por %p153, %p154
    %p157 = scmp.ne.s32.totalorder %s142, %s156
    %p158 = scmp.eq.s32.totalorder %s27, 0
    %p159 = por %p157, %p158
    %s161 = sadd.s32 %s160, 1
    %p164 = scmp.eq.s32.totalorder %s21, 3
    %p165 = scmp.ne.s32.totalorder %s160, %s162
    %p166 = scmp.eq.s32.totalorder %s21, 0
    %p167 = por %p165, %p166
    %p168 = scmp.ne.s32.totalorder %s160, %s162
    %p169 = scmp.eq.s32.totalorder %s26, 3
    %p170 = por %p168, %p169
    %p171 = scmp.ne.s32.totalorder %s162, %s163
    %p172 = scmp.eq.s32.totalorder %s26, 0
    %p173 = por %p171, %p172
    %p174 = scmp.ne.s32.totalorder %s162, %s163
    %p175 = scmp.eq.s32.totalorder %s27, 3
    %p176 = por %p174, %p175
    %p178 = scmp.ne.s32.totalorder %s163, %s177
    %p179 = scmp.eq.s32.totalorder %s27, 0
    %p180 = por %p178, %p179
    %s182 = sadd.s32 %s181, 1
    %p185 = scmp.eq.s32.totalorder %s21, 3
    %p186 = scmp.ne.s32.totalorder %s181, %s183
    %p187 = scmp.eq.s32.totalorder %s21, 0
    %p188 = por %p186, %p187
    %p189 = scmp.ne.s32.totalorder %s181, %s183
    %p190 = scmp.eq.s32.totalorder %s26, 3
    %p191 = por %p189, %p190
    %p192 = scmp.ne.s32.totalorder %s183, %s184
    %p193 = scmp.eq.s32.totalorder %s26, 0
    %p194 = por %p192, %p193
    %p195 = scmp.ne.s32.totalorder %s183, %s184
    %p196 = scmp.eq.s32.totalorder %s27, 3
    %p197 = por %p195, %p196
    %p199 = scmp.ne.s32.totalorder %s184, %s198
    %p200 = scmp.eq.s32.totalorder %s27, 0
    %p201 = por %p199, %p200
    %s203 = sadd.s32 %s202, 1
    %p206 = scmp.eq.s32.totalorder %s21, 3
    %p207 = scmp.ne.s32.totalorder %s202, %s204
    %p208 = scmp.eq.s32.totalorder %s21, 0
    %p209 = por %p207, %p208
    %p210 = scmp.ne.s32.totalorder %s202, %s204
    %p211 = scmp.eq.s32.totalorder %s26, 3
    %p212 = por %p210, %p211
    %p213 = scmp.ne.s32.totalorder %s204, %s205
    %p214 = scmp.eq.s32.totalorder %s26, 0
    %p215 = por %p213, %p214
    %p216 = scmp.ne.s32.totalorder %s204, %s205
    %p217 = scmp.eq.s32.totalorder %s27, 3
    %p218 = por %p216, %p217
    %p220 = scmp.ne.s32.totalorder %s205, %s219
    %p221 = scmp.eq.s32.totalorder %s27, 0
    %p222 = por %p220, %p221
    %s224 = sadd.s32 %s223, 1
    %p227 = scmp.eq.s32.totalorder %s21, 3
    %p228 = scmp.ne.s32.totalorder %s223, %s225
    %p229 = scmp.eq.s32.totalorder %s21, 0
    %p230 = por %p228, %p229
    %p231 = scmp.ne.s32.totalorder %s223, %s225
    %p232 = scmp.eq.s32.totalorder %s26, 3
    %p233 = por %p231, %p232
    %p234 = scmp.ne.s32.totalorder %s225, %s226
    %p235 = scmp.eq.s32.totalorder %s26, 0
    %p236 = por %p234, %p235
    %p237 = scmp.ne.s32.totalorder %s225, %s226
    %p238 = scmp.eq.s32.totalorder %s27, 3
    %p239 = por %p237, %p238
    %p241 = scmp.ne.s32.totalorder %s226, %s240
    %p242 = scmp.eq.s32.totalorder %s27, 0
    %p243 = por %p241, %p242
    %s245 = sadd.s32 %s244, 1
    %p248 = scmp.eq.s32.totalorder %s21, 3
    %p249 = scmp.ne.s32.totalorder %s244, %s246
    %p250 = scmp.eq.s32.totalorder %s21, 0
    %p251 = por %p249, %p250
    %p252 = scmp.ne.s32.totalorder %s244, %s246
    %p253 = scmp.eq.s32.totalorder %s26, 3
    %p254 = por %p252, %p253
    %p255 = scmp.ne.s32.totalorder %s246, %s247
    %p256 = scmp.eq.s32.totalorder %s26, 0
    %p257 = por %p255, %p256
    %p258 = scmp.ne.s32.totalorder %s246, %s247
    %p259 = scmp.eq.s32.totalorder %s27, 3
    %p260 = por %p258, %p259
    %p262 = scmp.ne.s32.totalorder %s247, %s261
    %p263 = scmp.eq.s32.totalorder %s27, 0
    %p264 = por %p262, %p263
    %s266 = sadd.s32 %s265, 1
    %p269 = scmp.eq.s32.totalorder %s21, 3
    %p270 = scmp.ne.s32.totalorder %s265, %s267
    %p271 = scmp.eq.s32.totalorder %s21, 0
    %p272 = por %p270, %p271
    %p273 = scmp.ne.s32.totalorder %s265, %s267
    %p274 = scmp.eq.s32.totalorder %s26, 3
    %p275 = por %p273, %p274
    %p276 = scmp.ne.s32.totalorder %s267, %s268
    %p277 = scmp.eq.s32.totalorder %s26, 0
    %p278 = por %p276, %p277
    %p279 = scmp.ne.s32.totalorder %s267, %s268
    %p280 = scmp.eq.s32.totalorder %s27, 3
    %p281 = por %p279, %p280
    %p283 = scmp.ne.s32.totalorder %s268, %s282
    %p284 = scmp.eq.s32.totalorder %s27, 0
    %p285 = por %p283, %p284
    %s287 = sadd.s32 %s286, 1
    %p290 = scmp.eq.s32.totalorder %s21, 3
    %p291 = scmp.ne.s32.totalorder %s286, %s288
    %p292 = scmp.eq.s32.totalorder %s21, 0
    %p293 = por %p291, %p292
    %p294 = scmp.ne.s32.totalorder %s286, %s288
    %p295 = scmp.eq.s32.totalorder %s26, 3
    %p296 = por %p294, %p295
    %p297 = scmp.ne.s32.totalorder %s288, %s289
    %p298 = scmp.eq.s32.totalorder %s26, 0
    %p299 = por %p297, %p298
    %p300 = scmp.ne.s32.totalorder %s288, %s289
    %p301 = scmp.eq.s32.totalorder %s27, 3
    %p302 = por %p300, %p301
    %p304 = scmp.ne.s32.totalorder %s289, %s303
    %p305 = scmp.eq.s32.totalorder %s27, 0
    %p306 = por %p304, %p305
    %s308 = sadd.s32 %s307, 1
    %p311 = scmp.eq.s32.totalorder %s21, 3
    %p312 = scmp.ne.s32.totalorder %s307, %s309
    %p313 = scmp.eq.s32.totalorder %s21, 0
    %p314 = por %p312, %p313
    %p315 = scmp.ne.s32.totalorder %s307, %s309
    %p316 = scmp.eq.s32.totalorder %s26, 3
    %p317 = por %p315, %p316
    %p318 = scmp.ne.s32.totalorder %s309, %s310
    %p319 = scmp.eq.s32.totalorder %s26, 0
    %p320 = por %p318, %p319
    %p321 = scmp.ne.s32.totalorder %s309, %s310
    %p322 = scmp.eq.s32.totalorder %s27, 3
    %p323 = por %p321, %p322
    %p325 = scmp.ne.s32.totalorder %s310, %s324
    %p326 = scmp.eq.s32.totalorder %s27, 0
    %p327 = por %p325, %p326
    %s329 = sadd.s32 %s328, 1
    %p332 = scmp.eq.s32.totalorder %s21, 3
    %p333 = scmp.ne.s32.totalorder %s328, %s330
    %p334 = scmp.eq.s32.totalorder %s21, 0
    %p335 = por %p333, %p334
    %p336 = scmp.ne.s32.totalorder %s328, %s330
    %p337 = scmp.eq.s32.totalorder %s26, 3
    %p338 = por %p336, %p337
    %p339 = scmp.ne.s32.totalorder %s330, %s331
    %p340 = scmp.eq.s32.totalorder %s26, 0
    %p341 = por %p339, %p340
    %p342 = scmp.ne.s32.totalorder %s330, %s331
    %p343 = scmp.eq.s32.totalorder %s27, 3
    %p344 = por %p342, %p343
    %p346 = scmp.ne.s32.totalorder %s331, %s345
    %p347 = scmp.eq.s32.totalorder %s27, 0
    %p348 = por %p346, %p347
    %s349 = ssub.s32 %s21, %s28
    %p350 = scmp.eq.s32.totalorder %s349, 0
    %s352 = sadd.s32 %s351, 1
    %s353 = scalar_select %p350, %s351, %s352
    %p356 = pneg %p350
    %p357 = scmp.eq.s32.totalorder %s21, 3
    %p358 = por %p356, %p357
    %p359 = scmp.ne.s32.totalorder %s351, %s354
    %p360 = scmp.eq.s32.totalorder %s21, 0
    %p361 = por %p359, %p360
    %p362 = scmp.ne.s32.totalorder %s351, %s354
    %p363 = scmp.eq.s32.totalorder %s26, 3
    %p364 = por %p362, %p363
    %p365 = scmp.ne.s32.totalorder %s354, %s355
    %p366 = scmp.eq.s32.totalorder %s26, 0
    %p367 = por %p365, %p366
    %p368 = scmp.ne.s32.totalorder %s354, %s355
    %p369 = scmp.eq.s32.totalorder %s27, 3
    %p370 = por %p368, %p369
    %p372 = scmp.ne.s32.totalorder %s355, %s371
    %p373 = scmp.eq.s32.totalorder %s27, 0
    %p374 = por %p372, %p373
    %p375 = scmp.le.s32.totalorder 1, %s21
    %p376 = scmp.lt.s32.totalorder %s21, 5
    %p377 = pnand %p375, %p376
    %p378 = pneg %p377
    // Predicated region
    $region9: #{_forward_prepared.1} parent=5 // pred_check
      _
    $region10: #{_forward_prepared.1} parent=5 // pred_check_branch
      %380 = sbr.rel (%p377) target = $region12
    $region11: #{_forward_prepared.1} parent=5 // pred_region
      %s381 = ssub.s32 %s21, 1
      // Predicated region
      $region13: #{_forward_prepared.1} parent=11 // pred_check
        %p382 = pneg %p68
      $region14: #{_forward_prepared.1} parent=11 // pred_check_branch
        %384 = sbr.rel (%p382) target = $region16
      $region15: #{_forward_prepared.1} parent=11 // pred_region
        _
      $region16: #{_forward_prepared.1} parent=11 // pred_fallthru
        _
      // Predicated region
      $region17: #{_forward_prepared.1} parent=11 // pred_check
        %p385 = pneg %p89
      $region18: #{_forward_prepared.1} parent=11 // pred_check_branch
        %387 = sbr.rel (%p385) target = $region20
      $region19: #{_forward_prepared.1} parent=11 // pred_region
        _
      $region20: #{_forward_prepared.1} parent=11 // pred_fallthru
        _
      // Predicated region
      $region21: #{_forward_prepared.1} parent=11 // pred_check
        %p388 = pneg %p110
      $region22: #{_forward_prepared.1} parent=11 // pred_check_branch
        %390 = sbr.rel (%p388) target = $region24
      $region23: #{_forward_prepared.1} parent=11 // pred_region
        _
      $region24: #{_forward_prepared.1} parent=11 // pred_fallthru
        _
      // Predicated region
      $region25: #{_forward_prepared.1} parent=11 // pred_check
        %p391 = pneg %p131
      $region26: #{_forward_prepared.1} parent=11 // pred_check_branch
        %393 = sbr.rel (%p391) target = $region28
      $region27: #{_forward_prepared.1} parent=11 // pred_region
        _
      $region28: #{_forward_prepared.1} parent=11 // pred_fallthru
        _
      // Predicated region
      $region29: #{_forward_prepared.1} parent=11 // pred_check
        %p394 = pneg %p152
      $region30: #{_forward_prepared.1} parent=11 // pred_check_branch
        %396 = sbr.rel (%p394) target = $region32
      $region31: #{_forward_prepared.1} parent=11 // pred_region
        _
      $region32: #{_forward_prepared.1} parent=11 // pred_fallthru
        _
      // Predicated region
      $region33: #{_forward_prepared.1} parent=11 // pred_check
        %p397 = pneg %p173
      $region34: #{_forward_prepared.1} parent=11 // pred_check_branch
        %399 = sbr.rel (%p397) target = $region36
      $region35: #{_forward_prepared.1} parent=11 // pred_region
        _
      $region36: #{_forward_prepared.1} parent=11 // pred_fallthru
        _
      // Predicated region
      $region37: #{_forward_prepared.1} parent=11 // pred_check
        %p400 = pneg %p194
      $region38: #{_forward_prepared.1} parent=11 // pred_check_branch
        %402 = sbr.rel (%p400) target = $region40
      $region39: #{_forward_prepared.1} parent=11 // pred_region
        _
      $region40: #{_forward_prepared.1} parent=11 // pred_fallthru
        _
      // Predicated region
      $region41: #{_forward_prepared.1} parent=11 // pred_check
        %p403 = pneg %p215
      $region42: #{_forward_prepared.1} parent=11 // pred_check_branch
        %405 = sbr.rel (%p403) target = $region44
      $region43: #{_forward_prepared.1} parent=11 // pred_region
        _
      $region44: #{_forward_prepared.1} parent=11 // pred_fallthru
        _
      // Predicated region
      $region45: #{_forward_prepared.1} parent=11 // pred_check
        %p406 = pneg %p236
      $region46: #{_forward_prepared.1} parent=11 // pred_check_branch
        %408 = sbr.rel (%p406) target = $region48
      $region47: #{_forward_prepared.1} parent=11 // pred_region
        _
      $region48: #{_forward_prepared.1} parent=11 // pred_fallthru
        _
      // Predicated region
      $region49: #{_forward_prepared.1} parent=11 // pred_check
        %p409 = pneg %p257
      $region50: #{_forward_prepared.1} parent=11 // pred_check_branch
        %411 = sbr.rel (%p409) target = $region52
      $region51: #{_forward_prepared.1} parent=11 // pred_region
        _
      $region52: #{_forward_prepared.1} parent=11 // pred_fallthru
        _
      // Predicated region
      $region53: #{_forward_prepared.1} parent=11 // pred_check
        %p412 = pneg %p278
      $region54: #{_forward_prepared.1} parent=11 // pred_check_branch
        %414 = sbr.rel (%p412) target = $region56
      $region55: #{_forward_prepared.1} parent=11 // pred_region
        _
      $region56: #{_forward_prepared.1} parent=11 // pred_fallthru
        _
      // Predicated region
      $region57: #{_forward_prepared.1} parent=11 // pred_check
        %p415 = pneg %p299
      $region58: #{_forward_prepared.1} parent=11 // pred_check_branch
        %417 = sbr.rel (%p415) target = $region60
      $region59: #{_forward_prepared.1} parent=11 // pred_region
        _
      $region60: #{_forward_prepared.1} parent=11 // pred_fallthru
        _
      // Predicated region
      $region61: #{_forward_prepared.1} parent=11 // pred_check
        %p418 = pneg %p320
      $region62: #{_forward_prepared.1} parent=11 // pred_check_branch
        %420 = sbr.rel (%p418) target = $region64
      $region63: #{_forward_prepared.1} parent=11 // pred_region
        _
      $region64: #{_forward_prepared.1} parent=11 // pred_fallthru
        _
      // Predicated region
      $region65: #{_forward_prepared.1} parent=11 // pred_check
        %p421 = pneg %p341
      $region66: #{_forward_prepared.1} parent=11 // pred_check_branch
        %423 = sbr.rel (%p421) target = $region68
      $region67: #{_forward_prepared.1} parent=11 // pred_region
        _
      $region68: #{_forward_prepared.1} parent=11 // pred_fallthru
        _
    $region12: #{_forward_prepared.1} parent=5 // pred_fallthru
      _
    %p424 = scmp.lt.s32.totalorder %s21, 4
    // Predicated region
    $region69: #{_forward_prepared.1} parent=5 // pred_check
      %p425 = pneg %p424
    $region70: #{_forward_prepared.1} parent=5 // pred_check_branch
      %427 = sbr.rel (%p425) target = $region72
    $region71: #{_forward_prepared.1} parent=5 // pred_region
      // Predicated region
      $region73: #{_forward_prepared.1} parent=71 // pred_check
        %p428 = pneg %p41
      $region74: #{_forward_prepared.1} parent=71 // pred_check_branch
        %430 = sbr.rel (%p428) target = $region76
      $region75: #{_forward_prepared.1} parent=71 // pred_region
        %p431 = scmp.lt.s32.totalorder %s21, 3
        %s432 = scalar_select %p431, %s21, 3
        %s433 = smul.addr %s432, 7
        %s434 = smul.addr %s433, 4
        %s435 = scalar_lea.vmem %s0, %s434
      $region76: #{_forward_prepared.1} parent=71 // pred_fallthru
        _
    $region72: #{_forward_prepared.1} parent=5 // pred_fallthru
      _
    %p436 = scmp.le.s32.totalorder 1, %s21
    %p437 = scmp.lt.s32.totalorder %s21, 5
    %p438 = pnand %p436, %p437
    %p439 = pneg %p438
    // Predicated region
    $region77: #{_forward_prepared.1} parent=5 // pred_check
      _
    $region78: #{_forward_prepared.1} parent=5 // pred_check_branch
      %441 = sbr.rel (%p438) target = $region80
    $region79: #{_forward_prepared.1} parent=5 // pred_region
      %s442 = ssub.s32 %s21, 1
      %p443 = scmp.lt.s32.totalorder %s26, 3
      %s444 = scalar_select %p443, %s26, 3
      %s445 = smul.addr %s444, 7
      %s446 = smul.addr %s445, 4
      %s447 = scalar_lea.vmem %s0, %s446
      %p448 = pneg %p47
      %p449 = pneg %p44
      %p450 = pneg %p68
      %p451 = pneg %p65
      %p452 = pneg %p89
      %p453 = pneg %p86
      %p454 = pneg %p110
      %p455 = pneg %p107
      %p456 = pneg %p131
      %p457 = pneg %p128
      %p458 = pneg %p152
      %p459 = pneg %p149
      %p460 = pneg %p173
      %p461 = pneg %p170
      %p462 = pneg %p194
      %p463 = pneg %p191
      %p464 = pneg %p215
      %p465 = pneg %p212
      %p466 = pneg %p236
      %p467 = pneg %p233
      %p468 = pneg %p257
      %p469 = pneg %p254
      %p470 = pneg %p278
      %p471 = pneg %p275
      %p472 = pneg %p299
      %p473 = pneg %p296
      %p474 = pneg %p320
      %p475 = pneg %p317
      %p476 = pneg %p341
      %p477 = pneg %p338
      %p478 = pneg %p367
      %p479 = pneg %p364
      %p480 = scmp.lt.s32.totalorder %s26, 3
      %s481 = scalar_select %p480, %s26, 3
      %s482 = smul.addr %s481, 8
      %s483 = scalar_lea.vmem %s15, %s482
      %p484 = scmp.lt.s32.totalorder %s26, 3
      %s485 = scalar_select %p484, %s26, 3
      %s486 = smul.addr %s485, 7
      %s487 = smul.addr %s486, 4
      %s488 = scalar_lea.vmem %s0, %s487
      %p489 = scmp.lt.s32.totalorder %s26, 3
      %s490 = scalar_select %p489, %s26, 3
      %s491 = smul.addr %s490, 8
      %s492 = scalar_lea.vmem %s15, %s491
      %v494 = vld [vmem:[%s488] sm:$0xff]
      %v495 = vld [vmem:[%s488 + $0x8] sm:$0xff]
      %v496 = vld [vmem:[%s488 + $0x10] sm:$0xff]
      %v497 = vld [vmem:[%s488 + $0x18] sm:$0xf]
      %v498 = vld [vmem:[%s1] sm:$0xff]
      %v499 = vld [vmem:[%s1 + $0x8] sm:$0xff]
      %v500 = vld [vmem:[%s1 + $0x10] sm:$0xff]
      %v501 = vld [vmem:[%s1 + $0x18] sm:$0xff]
      %v502 = vld [vmem:[%s1 + $0x20] sm:$0xff]
      %v503 = vld [vmem:[%s1 + $0x28] sm:$0xff]
      %v504 = vld [vmem:[%s1 + $0x30] sm:$0xff]
      %v505 = vld [vmem:[%s1 + $0x38] sm:$0xff]
      %v506 = vld [vmem:[%s1 + $0x40] sm:$0xff]
      %v507 = vld [vmem:[%s1 + $0x48] sm:$0xff]
      %v508 = vld [vmem:[%s1 + $0x50] sm:$0xff]
      %v509 = vld [vmem:[%s1 + $0x58] sm:$0xff]
      %v510 = vld [vmem:[%s1 + $0x60] sm:$0xff]
      %v511 = vld [vmem:[%s1 + $0x68] sm:$0xff]
      %v512 = vld [vmem:[%s1 + $0x70] sm:$0xff]
      %v513 = vld [vmem:[%s1 + $0x78] sm:$0xff]
      %v514 = vld [vmem:[%s1 + $0x80] sm:$0xff]
      %v515 = vld [vmem:[%s1 + $0x88] sm:$0xff]
      %v516 = vld [vmem:[%s1 + $0x90] sm:$0xff]
      %v517 = vld [vmem:[%s1 + $0x98] sm:$0xff]
      %v518 = vld [vmem:[%s1 + $0xa0] sm:$0xff]
      %v519 = vld [vmem:[%s1 + $0xa8] sm:$0xff]
      %v520 = vld [vmem:[%s1 + $0xb0] sm:$0xff]
      %v521 = vld [vmem:[%s1 + $0xb8] sm:$0xff]
      %v522 = vld [vmem:[%s1 + $0xc0] sm:$0xff]
      %v523 = vld [vmem:[%s1 + $0xc8] sm:$0xff]
      %v524 = vld [vmem:[%s1 + $0xd0] sm:$0xff]
      %v525 = vld [vmem:[%s1 + $0xd8] sm:$0xff]
      %v526 = vld [vmem:[%s1 + $0xe0] sm:$0xff]
      %v527 = vld [vmem:[%s1 + $0xe8] sm:$0xff]
      %v528 = vld [vmem:[%s1 + $0xf0] sm:$0xff]
      %v529 = vld [vmem:[%s1 + $0xf8] sm:$0xff]
      %v530 = vld [vmem:[%s1 + $0x100] sm:$0xff]
      %v531 = vld [vmem:[%s1 + $0x108] sm:$0xff]
      %v532 = vld [vmem:[%s1 + $0x110] sm:$0xff]
      %v533 = vld [vmem:[%s1 + $0x118] sm:$0xff]
      %v534 = vld [vmem:[%s1 + $0x120] sm:$0xff]
      %v535 = vld [vmem:[%s1 + $0x128] sm:$0xff]
      %v536 = vld [vmem:[%s1 + $0x130] sm:$0xff]
      %v537 = vld [vmem:[%s1 + $0x138] sm:$0xff]
      %v538 = vld [vmem:[%s1 + $0x140] sm:$0xff]
      %v539 = vld [vmem:[%s1 + $0x148] sm:$0xff]
      %v540 = vld [vmem:[%s1 + $0x150] sm:$0xff]
      %v541 = vld [vmem:[%s1 + $0x158] sm:$0xff]
      %v542 = vld [vmem:[%s1 + $0x160] sm:$0xff]
      %v543 = vld [vmem:[%s1 + $0x168] sm:$0xff]
      %v544 = vld [vmem:[%s1 + $0x170] sm:$0xff]
      %v545 = vld [vmem:[%s1 + $0x178] sm:$0xff]
      %v546 = vld [vmem:[%s1 + $0x180] sm:$0xff]
      %v547 = vld [vmem:[%s1 + $0x188] sm:$0xff]
      %v548 = vld [vmem:[%s1 + $0x190] sm:$0xff]
      %v549 = vld [vmem:[%s1 + $0x198] sm:$0xff]
      %v550 = vld [vmem:[%s1 + $0x1a0] sm:$0xff]
      %v551 = vld [vmem:[%s1 + $0x1a8] sm:$0xff]
      %v552 = vld [vmem:[%s1 + $0x1b0] sm:$0xff]
      %v553 = vld [vmem:[%s1 + $0x1b8] sm:$0xff]
      %v554 = vld [vmem:[%s1 + $0x1c0] sm:$0xff]
      %v555 = vld [vmem:[%s1 + $0x1c8] sm:$0xff]
      %v556 = vld [vmem:[%s1 + $0x1d0] sm:$0xff]
      %v557 = vld [vmem:[%s1 + $0x1d8] sm:$0xff]
      %v558 = vld [vmem:[%s1 + $0x1e0] sm:$0xff]
      %v559 = vld [vmem:[%s1 + $0x1e8] sm:$0xff]
      %v560 = vld [vmem:[%s1 + $0x1f0] sm:$0xff]
      %v561 = vld [vmem:[%s1 + $0x1f8] sm:$0xff]
      %v562 = vld [vmem:[%s1 + $0x200] sm:$0xff]
      %v563 = vld [vmem:[%s1 + $0x208] sm:$0xff]
      %v564 = vld [vmem:[%s1 + $0x210] sm:$0xff]
      %v565 = vld [vmem:[%s1 + $0x218] sm:$0xff]
      %v566 = vld [vmem:[%s1 + $0x220] sm:$0xff]
      %v567 = vld [vmem:[%s1 + $0x228] sm:$0xff]
      %v568 = vld [vmem:[%s1 + $0x230] sm:$0xff]
      %v569 = vld [vmem:[%s1 + $0x238] sm:$0xff]
      %v570 = vld [vmem:[%s1 + $0x240] sm:$0xff]
      %v571 = vld [vmem:[%s1 + $0x248] sm:$0xff]
      %v572 = vld [vmem:[%s1 + $0x250] sm:$0xff]
      %v573 = vld [vmem:[%s1 + $0x258] sm:$0xff]
      %v574 = vld [vmem:[%s1 + $0x260] sm:$0xff]
      %v575 = vld [vmem:[%s1 + $0x268] sm:$0xff]
      %v576 = vld [vmem:[%s1 + $0x270] sm:$0xff]
      %v577 = vld [vmem:[%s1 + $0x278] sm:$0xff]
      %v578 = vld [vmem:[%s1 + $0x280] sm:$0xff]
      %v579 = vld [vmem:[%s1 + $0x288] sm:$0xff]
      %v580 = vld [vmem:[%s1 + $0x290] sm:$0xff]
      %v581 = vld [vmem:[%s1 + $0x298] sm:$0xff]
      %v582 = vld [vmem:[%s1 + $0x2a0] sm:$0xff]
      %v583 = vld [vmem:[%s1 + $0x2a8] sm:$0xff]
      %v584 = vld [vmem:[%s1 + $0x2b0] sm:$0xff]
      %v585 = vld [vmem:[%s1 + $0x2b8] sm:$0xff]
      %v586 = vld [vmem:[%s1 + $0x2c0] sm:$0xff]
      %v587 = vld [vmem:[%s1 + $0x2c8] sm:$0xff]
      %v588 = vld [vmem:[%s1 + $0x2d0] sm:$0xff]
      %v589 = vld [vmem:[%s1 + $0x2d8] sm:$0xff]
      %v590 = vld [vmem:[%s1 + $0x2e0] sm:$0xff]
      %v591 = vld [vmem:[%s1 + $0x2e8] sm:$0xff]
      %v592 = vld [vmem:[%s1 + $0x2f0] sm:$0xff]
      %v593 = vld [vmem:[%s1 + $0x2f8] sm:$0xff]
      %v594 = vld [vmem:[%s1 + $0x300] sm:$0xff]
      %v595 = vld [vmem:[%s1 + $0x308] sm:$0xff]
      %v600 = vunpack.c.l.b16 %v494
      %v601 = vunpack.c.h.b16 %v494
      %v602 = vunpack.c.l.b16 %v495
      %v603 = vunpack.c.h.b16 %v495
      %v604 = vunpack.c.l.b16 %v496
      %v605 = vunpack.c.h.b16 %v496
      %v606 = vunpack.c.l.b16 %v497
      %v607 = vpack.c.b16 %v600, %v600
      %v608 = vpack.c.b16 %v601, %v601
      %v609 = vpack.c.b16 %v602, %v602
      %v610 = vpack.c.b16 %v603, %v603
      %v611 = vpack.c.b16 %v604, %v604
      %v612 = vpack.c.b16 %v605, %v605
      %v613 = vpack.c.b16 %v606, %v606
      %v718 = vunpack.c.l.b16 %v498
      %v719 = vunpack.c.h.b16 %v498
      %v720 = vunpack.c.l.b16 %v499
      %v721 = vunpack.c.h.b16 %v499
      %v722 = vunpack.c.l.b16 %v500
      %v723 = vunpack.c.h.b16 %v500
      %v724 = vunpack.c.l.b16 %v501
      %v725 = vunpack.c.h.b16 %v501
      %v726 = vunpack.c.l.b16 %v502
      %v727 = vunpack.c.h.b16 %v502
      %v728 = vunpack.c.l.b16 %v503
      %v729 = vunpack.c.h.b16 %v503
      %v730 = vunpack.c.l.b16 %v504
      %v731 = vunpack.c.h.b16 %v504
      %v732 = vunpack.c.l.b16 %v505
      %v733 = vunpack.c.h.b16 %v505
      %v734 = vunpack.c.l.b16 %v506
      %v735 = vunpack.c.h.b16 %v506
      %v736 = vunpack.c.l.b16 %v507
      %v737 = vunpack.c.h.b16 %v507
      %v738 = vunpack.c.l.b16 %v508
      %v739 = vunpack.c.h.b16 %v508
      %v740 = vunpack.c.l.b16 %v509
      %v741 = vunpack.c.h.b16 %v509
      %v742 = vunpack.c.l.b16 %v510
      %v743 = vunpack.c.h.b16 %v510
      %v744 = vunpack.c.l.b16 %v511
      %v745 = vunpack.c.h.b16 %v511
      %v746 = vunpack.c.l.b16 %v512
      %v747 = vunpack.c.h.b16 %v512
      %v748 = vunpack.c.l.b16 %v513
      %v749 = vunpack.c.h.b16 %v513
      %v750 = vunpack.c.l.b16 %v514
      %v751 = vunpack.c.h.b16 %v514
      %v752 = vunpack.c.l.b16 %v515
      %v753 = vunpack.c.h.b16 %v515
      %v754 = vunpack.c.l.b16 %v516
      %v755 = vunpack.c.h.b16 %v516
      %v756 = vunpack.c.l.b16 %v517
      %v757 = vunpack.c.h.b16 %v517
      %v758 = vunpack.c.l.b16 %v518
      %v759 = vunpack.c.h.b16 %v518
      %v760 = vunpack.c.l.b16 %v519
      %v761 = vunpack.c.h.b16 %v519
      %v762 = vunpack.c.l.b16 %v520
      %v763 = vunpack.c.h.b16 %v520
      %v764 = vunpack.c.l.b16 %v521
      %v765 = vunpack.c.h.b16 %v521
      %v766 = vunpack.c.l.b16 %v522
      %v767 = vunpack.c.h.b16 %v522
      %v768 = vunpack.c.l.b16 %v523
      %v769 = vunpack.c.h.b16 %v523
      %v770 = vunpack.c.l.b16 %v524
      %v771 = vunpack.c.h.b16 %v524
      %v772 = vunpack.c.l.b16 %v525
      %v773 = vunpack.c.h.b16 %v525
      %v774 = vunpack.c.l.b16 %v526
      %v775 = vunpack.c.h.b16 %v526
      %v776 = vunpack.c.l.b16 %v527
      %v777 = vunpack.c.h.b16 %v527
      %v778 = vunpack.c.l.b16 %v528
      %v779 = vunpack.c.h.b16 %v528
      %v780 = vunpack.c.l.b16 %v529
      %v781 = vunpack.c.h.b16 %v529
      %v782 = vunpack.c.l.b16 %v530
      %v783 = vunpack.c.h.b16 %v530
      %v784 = vunpack.c.l.b16 %v531
      %v785 = vunpack.c.h.b16 %v531
      %v786 = vunpack.c.l.b16 %v532
      %v787 = vunpack.c.h.b16 %v532
      %v788 = vunpack.c.l.b16 %v533
      %v789 = vunpack.c.h.b16 %v533
      %v790 = vunpack.c.l.b16 %v534
      %v791 = vunpack.c.h.b16 %v534
      %v792 = vunpack.c.l.b16 %v535
      %v793 = vunpack.c.h.b16 %v535
      %v794 = vunpack.c.l.b16 %v536
      %v795 = vunpack.c.h.b16 %v536
      %v796 = vunpack.c.l.b16 %v537
      %v797 = vunpack.c.h.b16 %v537
      %v798 = vunpack.c.l.b16 %v538
      %v799 = vunpack.c.h.b16 %v538
      %v800 = vunpack.c.l.b16 %v539
      %v801 = vunpack.c.h.b16 %v539
      %v802 = vunpack.c.l.b16 %v540
      %v803 = vunpack.c.h.b16 %v540
      %v804 = vunpack.c.l.b16 %v541
      %v805 = vunpack.c.h.b16 %v541
      %v806 = vunpack.c.l.b16 %v542
      %v807 = vunpack.c.h.b16 %v542
      %v808 = vunpack.c.l.b16 %v543
      %v809 = vunpack.c.h.b16 %v543
      %v810 = vunpack.c.l.b16 %v544
      %v811 = vunpack.c.h.b16 %v544
      %v812 = vunpack.c.l.b16 %v545
      %v813 = vunpack.c.h.b16 %v545
      %v814 = vunpack.c.l.b16 %v546
      %v815 = vunpack.c.h.b16 %v546
      %v816 = vunpack.c.l.b16 %v547
      %v817 = vunpack.c.h.b16 %v547
      %v818 = vunpack.c.l.b16 %v548
      %v819 = vunpack.c.h.b16 %v548
      %v820 = vunpack.c.l.b16 %v549
      %v821 = vunpack.c.h.b16 %v549
      %v822 = vunpack.c.l.b16 %v550
      %v823 = vunpack.c.h.b16 %v550
      %v824 = vunpack.c.l.b16 %v551
      %v825 = vunpack.c.h.b16 %v551
      %v826 = vunpack.c.l.b16 %v552
      %v827 = vunpack.c.h.b16 %v552
      %v828 = vunpack.c.l.b16 %v553
      %v829 = vunpack.c.h.b16 %v553
      %v830 = vunpack.c.l.b16 %v554
      %v831 = vunpack.c.h.b16 %v554
      %v832 = vunpack.c.l.b16 %v555
      %v833 = vunpack.c.h.b16 %v555
      %v834 = vunpack.c.l.b16 %v556
      %v835 = vunpack.c.h.b16 %v556
      %v836 = vunpack.c.l.b16 %v557
      %v837 = vunpack.c.h.b16 %v557
      %v838 = vunpack.c.l.b16 %v558
      %v839 = vunpack.c.h.b16 %v558
      %v840 = vunpack.c.l.b16 %v559
      %v841 = vunpack.c.h.b16 %v559
      %v842 = vunpack.c.l.b16 %v560
      %v843 = vunpack.c.h.b16 %v560
      %v844 = vunpack.c.l.b16 %v561
      %v845 = vunpack.c.h.b16 %v561
      %v846 = vunpack.c.l.b16 %v562
      %v847 = vunpack.c.h.b16 %v562
      %v848 = vunpack.c.l.b16 %v563
      %v849 = vunpack.c.h.b16 %v563
      %v850 = vunpack.c.l.b16 %v564
      %v851 = vunpack.c.h.b16 %v564
      %v852 = vunpack.c.l.b16 %v565
      %v853 = vunpack.c.h.b16 %v565
      %v854 = vunpack.c.l.b16 %v566
      %v855 = vunpack.c.h.b16 %v566
      %v856 = vunpack.c.l.b16 %v567
      %v857 = vunpack.c.h.b16 %v567
      %v858 = vunpack.c.l.b16 %v568
      %v859 = vunpack.c.h.b16 %v568
      %v860 = vunpack.c.l.b16 %v569
      %v861 = vunpack.c.h.b16 %v569
      %v862 = vunpack.c.l.b16 %v570
      %v863 = vunpack.c.h.b16 %v570
      %v864 = vunpack.c.l.b16 %v571
      %v865 = vunpack.c.h.b16 %v571
      %v866 = vunpack.c.l.b16 %v572
      %v867 = vunpack.c.h.b16 %v572
      %v868 = vunpack.c.l.b16 %v573
      %v869 = vunpack.c.h.b16 %v573
      %v870 = vunpack.c.l.b16 %v574
      %v871 = vunpack.c.h.b16 %v574
      %v872 = vunpack.c.l.b16 %v575
      %v873 = vunpack.c.h.b16 %v575
      %v874 = vunpack.c.l.b16 %v576
      %v875 = vunpack.c.h.b16 %v576
      %v876 = vunpack.c.l.b16 %v577
      %v877 = vunpack.c.h.b16 %v577
      %v878 = vunpack.c.l.b16 %v578
      %v879 = vunpack.c.h.b16 %v578
      %v880 = vunpack.c.l.b16 %v579
      %v881 = vunpack.c.h.b16 %v579
      %v882 = vunpack.c.l.b16 %v580
      %v883 = vunpack.c.h.b16 %v580
      %v884 = vunpack.c.l.b16 %v581
      %v885 = vunpack.c.h.b16 %v581
      %v886 = vunpack.c.l.b16 %v582
      %v887 = vunpack.c.h.b16 %v582
      %v888 = vunpack.c.l.b16 %v583
      %v889 = vunpack.c.h.b16 %v583
      %v890 = vunpack.c.l.b16 %v584
      %v891 = vunpack.c.h.b16 %v584
      %v892 = vunpack.c.l.b16 %v585
      %v893 = vunpack.c.h.b16 %v585
      %v894 = vunpack.c.l.b16 %v586
      %v895 = vunpack.c.h.b16 %v586
      %v896 = vunpack.c.l.b16 %v587
      %v897 = vunpack.c.h.b16 %v587
      %v898 = vunpack.c.l.b16 %v588
      %v899 = vunpack.c.h.b16 %v588
      %v900 = vunpack.c.l.b16 %v589
      %v901 = vunpack.c.h.b16 %v589
      %v902 = vunpack.c.l.b16 %v590
      %v903 = vunpack.c.h.b16 %v590
      %v904 = vunpack.c.l.b16 %v591
      %v905 = vunpack.c.h.b16 %v591
      %v906 = vunpack.c.l.b16 %v592
      %v907 = vunpack.c.h.b16 %v592
      %v908 = vunpack.c.l.b16 %v593
      %v909 = vunpack.c.h.b16 %v593
      %v910 = vunpack.c.l.b16 %v594
      %v911 = vunpack.c.h.b16 %v594
      %v912 = vunpack.c.l.b16 %v595
      %v913 = vunpack.c.h.b16 %v595
      %v914 = vpack.c.b16 %v720, %v718
      %v915 = vpack.c.b16 %v721, %v719
      %v916 = vpack.c.b16 %v724, %v722
      %v917 = vpack.c.b16 %v725, %v723
      %v918 = vpack.c.b16 %v728, %v726
      %v919 = vpack.c.b16 %v729, %v727
      %v920 = vpack.c.b16 %v732, %v730
      %v921 = vpack.c.b16 %v733, %v731
      %v922 = vpack.c.b16 %v736, %v734
      %v923 = vpack.c.b16 %v737, %v735
      %v924 = vpack.c.b16 %v740, %v738
      %v925 = vpack.c.b16 %v741, %v739
      %v926 = vpack.c.b16 %v744, %v742
      %v927 = vpack.c.b16 %v745, %v743
      %v928 = vpack.c.b16 %v748, %v746
      %v929 = vpack.c.b16 %v749, %v747
      %v930 = vpack.c.b16 %v752, %v750
      %v931 = vpack.c.b16 %v753, %v751
      %v932 = vpack.c.b16 %v756, %v754
      %v933 = vpack.c.b16 %v757, %v755
      %v934 = vpack.c.b16 %v760, %v758
      %v935 = vpack.c.b16 %v761, %v759
      %v936 = vpack.c.b16 %v764, %v762
      %v937 = vpack.c.b16 %v765, %v763
      %v938 = vpack.c.b16 %v768, %v766
      %v939 = vpack.c.b16 %v769, %v767
      %v940 = vpack.c.b16 %v772, %v770
      %v941 = vpack.c.b16 %v773, %v771
      %v942 = vpack.c.b16 %v776, %v774
      %v943 = vpack.c.b16 %v777, %v775
      %v944 = vpack.c.b16 %v780, %v778
      %v945 = vpack.c.b16 %v781, %v779
      %v946 = vpack.c.b16 %v784, %v782
      %v947 = vpack.c.b16 %v785, %v783
      %v948 = vpack.c.b16 %v788, %v786
      %v949 = vpack.c.b16 %v789, %v787
      %v950 = vpack.c.b16 %v792, %v790
      %v951 = vpack.c.b16 %v793, %v791
      %v952 = vpack.c.b16 %v796, %v794
      %v953 = vpack.c.b16 %v797, %v795
      %v954 = vpack.c.b16 %v800, %v798
      %v955 = vpack.c.b16 %v801, %v799
      %v956 = vpack.c.b16 %v804, %v802
      %v957 = vpack.c.b16 %v805, %v803
      %v958 = vpack.c.b16 %v808, %v806
      %v959 = vpack.c.b16 %v809, %v807
      %v960 = vpack.c.b16 %v812, %v810
      %v961 = vpack.c.b16 %v813, %v811
      %v962 = vpack.c.b16 %v816, %v814
      %v963 = vpack.c.b16 %v817, %v815
      %v964 = vpack.c.b16 %v820, %v818
      %v965 = vpack.c.b16 %v821, %v819
      %v966 = vpack.c.b16 %v824, %v822
      %v967 = vpack.c.b16 %v825, %v823
      %v968 = vpack.c.b16 %v828, %v826
      %v969 = vpack.c.b16 %v829, %v827
      %v970 = vpack.c.b16 %v832, %v830
      %v971 = vpack.c.b16 %v833, %v831
      %v972 = vpack.c.b16 %v836, %v834
      %v973 = vpack.c.b16 %v837, %v835
      %v974 = vpack.c.b16 %v840, %v838
      %v975 = vpack.c.b16 %v841, %v839
      %v976 = vpack.c.b16 %v844, %v842
      %v977 = vpack.c.b16 %v845, %v843
      %v978 = vpack.c.b16 %v848, %v846
      %v979 = vpack.c.b16 %v849, %v847
      %v980 = vpack.c.b16 %v852, %v850
      %v981 = vpack.c.b16 %v853, %v851
      %v982 = vpack.c.b16 %v856, %v854
      %v983 = vpack.c.b16 %v857, %v855
      %v984 = vpack.c.b16 %v860, %v858
      %v985 = vpack.c.b16 %v861, %v859
      %v986 = vpack.c.b16 %v864, %v862
      %v987 = vpack.c.b16 %v865, %v863
      %v988 = vpack.c.b16 %v868, %v866
      %v989 = vpack.c.b16 %v869, %v867
      %v990 = vpack.c.b16 %v872, %v870
      %v991 = vpack.c.b16 %v873, %v871
      %v992 = vpack.c.b16 %v876, %v874
      %v993 = vpack.c.b16 %v877, %v875
      %v994 = vpack.c.b16 %v880, %v878
      %v995 = vpack.c.b16 %v881, %v879
      %v996 = vpack.c.b16 %v884, %v882
      %v997 = vpack.c.b16 %v885, %v883
      %v998 = vpack.c.b16 %v888, %v886
      %v999 = vpack.c.b16 %v889, %v887
      %v1000 = vpack.c.b16 %v892, %v890
      %v1001 = vpack.c.b16 %v893, %v891
      %v1002 = vpack.c.b16 %v896, %v894
      %v1003 = vpack.c.b16 %v897, %v895
      %v1004 = vpack.c.b16 %v900, %v898
      %v1005 = vpack.c.b16 %v901, %v899
      %v1006 = vpack.c.b16 %v904, %v902
      %v1007 = vpack.c.b16 %v905, %v903
      %v1008 = vpack.c.b16 %v908, %v906
      %v1009 = vpack.c.b16 %v909, %v907
      %v1010 = vpack.c.b16 %v912, %v910
      %v1011 = vpack.c.b16 %v913, %v911
      %vm1110 = vcmask 130048
      %v1112 = vsel %vm1110, %v613, 0
      %1114 = vmatprep.subr.bf16.mxu0 %v929
      %1115 = vmatpush1.bf16.msra.mxu0 %v928
      %1116 = vmatprep.subr.bf16.mxu0 %v927
      %1117 = vmatpush1.bf16.msra.mxu0 %v926
      %1118 = vmatprep.subr.bf16.mxu0 %v925
      %1119 = vmatpush1.bf16.msra.mxu0 %v924
      %1120 = vmatprep.subr.bf16.mxu0 %v923
      %1121 = vmatpush1.bf16.msra.mxu0 %v922
      %1122 = vmatprep.subr.bf16.mxu0 %v921
      %1123 = vmatpush1.bf16.msra.mxu0 %v920
      %1124 = vmatprep.subr.bf16.mxu0 %v919
      %1125 = vmatpush1.bf16.msra.mxu0 %v918
      %1126 = vmatprep.subr.bf16.mxu0 %v917
      %1127 = vmatpush1.bf16.msra.mxu0 %v916
      %1128 = vmatprep.subr.bf16.mxu0 %v915
      %1129 = vmatpush1.bf16.msra.mxu0 %v914
      %1130 = vmatprep.subr.bf16.mxu0 %v945
      %1131 = vmatpush2.bf16.msra.mxu0 %v944
      %1132 = vmatprep.subr.bf16.mxu0 %v943
      %1133 = vmatpush2.bf16.msra.mxu0 %v942
      %1134 = vmatprep.subr.bf16.mxu0 %v941
      %1135 = vmatpush2.bf16.msra.mxu0 %v940
      %1136 = vmatprep.subr.bf16.mxu0 %v939
      %1137 = vmatpush2.bf16.msra.mxu0 %v938
      %1138 = vmatprep.subr.bf16.mxu0 %v937
      %1139 = vmatpush2.bf16.msra.mxu0 %v936
      %1140 = vmatprep.subr.bf16.mxu0 %v935
      %1141 = vmatpush2.bf16.msra.mxu0 %v934
      %1142 = vmatprep.subr.bf16.mxu0 %v933
      %1143 = vmatpush2.bf16.msra.mxu0 %v932
      %1144 = vmatprep.subr.bf16.mxu0 %v931
      %1145 = vmatpush2.bf16.msra.mxu0 %v930
      %1146 = vmatprep.mubr.bf16.mxu0 %v608
      %1147 = vmatmul.mubr.bf16.gmra.mxu0 %v607
      %v1148 = vpop.f32.mrf.mxu0
      %v1149 = vadd.f32 0.0, %v1148
      %v1150 = vpop.f32.mrf.mxu0
      %v1151 = vadd.f32 0.0, %v1150
      %v1152 = vpop.f32.mrf.mxu0
      %v1153 = vpop.f32.mrf.mxu0
      %1154 = vdwg.mxu0
      %1155 = vmatprep.subr.bf16.mxu0 %v961
      %1156 = vmatpush1.bf16.msra.mxu0 %v960
      %1157 = vmatprep.subr.bf16.mxu0 %v959
      %1158 = vmatpush1.bf16.msra.mxu0 %v958
      %1159 = vmatprep.subr.bf16.mxu0 %v957
      %1160 = vmatpush1.bf16.msra.mxu0 %v956
      %1161 = vmatprep.subr.bf16.mxu0 %v955
      %1162 = vmatpush1.bf16.msra.mxu0 %v954
      %1163 = vmatprep.subr.bf16.mxu0 %v953
      %1164 = vmatpush1.bf16.msra.mxu0 %v952
      %1165 = vmatprep.subr.bf16.mxu0 %v951
      %1166 = vmatpush1.bf16.msra.mxu0 %v950
      %1167 = vmatprep.subr.bf16.mxu0 %v949
      %1168 = vmatpush1.bf16.msra.mxu0 %v948
      %1169 = vmatprep.subr.bf16.mxu0 %v947
      %1170 = vmatpush1.bf16.msra.mxu0 %v946
      %1171 = vmatprep.subr.bf16.mxu0 %v977
      %1172 = vmatpush2.bf16.msra.mxu0 %v976
      %1173 = vmatprep.subr.bf16.mxu0 %v975
      %1174 = vmatpush2.bf16.msra.mxu0 %v974
      %1175 = vmatprep.subr.bf16.mxu0 %v973
      %1176 = vmatpush2.bf16.msra.mxu0 %v972
      %1177 = vmatprep.subr.bf16.mxu0 %v971
      %1178 = vmatpush2.bf16.msra.mxu0 %v970
      %1179 = vmatprep.subr.bf16.mxu0 %v969
      %1180 = vmatpush2.bf16.msra.mxu0 %v968
      %1181 = vmatprep.subr.bf16.mxu0 %v967
      %1182 = vmatpush2.bf16.msra.mxu0 %v966
      %1183 = vmatprep.subr.bf16.mxu0 %v965
      %1184 = vmatpush2.bf16.msra.mxu0 %v964
      %1185 = vmatprep.subr.bf16.mxu0 %v963
      %1186 = vmatpush2.bf16.msra.mxu0 %v962
      %1187 = vmatprep.mubr.bf16.mxu0 %v610
      %1188 = vmatmul.mubr.bf16.gmra.mxu0 %v609
      %v1189 = vpop.f32.mrf.mxu0
      %v1190 = vadd.f32 %v1149, %v1189
      %v1191 = vpop.f32.mrf.mxu0
      %v1192 = vadd.f32 %v1151, %v1191
      %v1193 = vpop.f32.mrf.mxu0
      %v1194 = vpop.f32.mrf.mxu0
      %1195 = vdwg.mxu0
      %1196 = vmatprep.subr.bf16.mxu0 %v993
      %1197 = vmatpush1.bf16.msra.mxu0 %v992
      %1198 = vmatprep.subr.bf16.mxu0 %v991
      %1199 = vmatpush1.bf16.msra.mxu0 %v990
      %1200 = vmatprep.subr.bf16.mxu0 %v989
      %1201 = vmatpush1.bf16.msra.mxu0 %v988
      %1202 = vmatprep.subr.bf16.mxu0 %v987
      %1203 = vmatpush1.bf16.msra.mxu0 %v986
      %1204 = vmatprep.subr.bf16.mxu0 %v985
      %1205 = vmatpush1.bf16.msra.mxu0 %v984
      %1206 = vmatprep.subr.bf16.mxu0 %v983
      %1207 = vmatpush1.bf16.msra.mxu0 %v982
      %1208 = vmatprep.subr.bf16.mxu0 %v981
      %1209 = vmatpush1.bf16.msra.mxu0 %v980
      %1210 = vmatprep.subr.bf16.mxu0 %v979
      %1211 = vmatpush1.bf16.msra.mxu0 %v978
      %1212 = vmatprep.subr.bf16.mxu0 %v1009
      %1213 = vmatpush2.bf16.msra.mxu0 %v1008
      %1214 = vmatprep.subr.bf16.mxu0 %v1007
      %1215 = vmatpush2.bf16.msra.mxu0 %v1006
      %1216 = vmatprep.subr.bf16.mxu0 %v1005
      %1217 = vmatpush2.bf16.msra.mxu0 %v1004
      %1218 = vmatprep.subr.bf16.mxu0 %v1003
      %1219 = vmatpush2.bf16.msra.mxu0 %v1002
      %1220 = vmatprep.subr.bf16.mxu0 %v1001
      %1221 = vmatpush2.bf16.msra.mxu0 %v1000
      %1222 = vmatprep.subr.bf16.mxu0 %v999
      %1223 = vmatpush2.bf16.msra.mxu0 %v998
      %1224 = vmatprep.subr.bf16.mxu0 %v997
      %1225 = vmatpush2.bf16.msra.mxu0 %v996
      %1226 = vmatprep.subr.bf16.mxu0 %v995
      %1227 = vmatpush2.bf16.msra.mxu0 %v994
      %1228 = vmatprep.mubr.bf16.mxu0 %v612
      %1229 = vmatmul.mubr.bf16.gmra.mxu0 %v611
      %v1230 = vpop.f32.mrf.mxu0
      %v1231 = vadd.f32 %v1190, %v1230
      %v1232 = vpop.f32.mrf.mxu0
      %v1233 = vadd.f32 %v1192, %v1232
      %v1234 = vpop.f32.mrf.mxu0
      %v1235 = vpop.f32.mrf.mxu0
      %1236 = vdwg.mxu0
      %1237 = vmatprep.subr.bf16.mxu0 0
      %1238 = vmatpush1.bf16.msra.mxu0 0
      %1239 = vmatprep.subr.bf16.mxu0 0
      %1240 = vmatpush1.bf16.msra.mxu0 0
      %1241 = vmatprep.subr.bf16.mxu0 0
      %1242 = vmatpush1.bf16.msra.mxu0 0
      %1243 = vmatprep.subr.bf16.mxu0 0
      %1244 = vmatpush1.bf16.msra.mxu0 0
      %1245 = vmatprep.subr.bf16.mxu0 0
      %1246 = vmatpush1.bf16.msra.mxu0 0
      %1247 = vmatprep.subr.bf16.mxu0 0
      %1248 = vmatpush1.bf16.msra.mxu0 0
      %1249 = vmatprep.subr.bf16.mxu0 0
      %1250 = vmatpush1.bf16.msra.mxu0 0
      %1251 = vmatprep.subr.bf16.mxu0 %v1011
      %1252 = vmatpush1.bf16.msra.mxu0 %v1010
      %1253 = vmatprep.subr.bf16.mxu0 0
      %1254 = vmatpush2.bf16.msra.mxu0 0
      %1255 = vmatprep.subr.bf16.mxu0 0
      %1256 = vmatpush2.bf16.msra.mxu0 0
      %1257 = vmatprep.subr.bf16.mxu0 0
      %1258 = vmatpush2.bf16.msra.mxu0 0
      %1259 = vmatprep.subr.bf16.mxu0 0
      %1260 = vmatpush2.bf16.msra.mxu0 0
      %1261 = vmatprep.subr.bf16.mxu0 0
      %1262 = vmatpush2.bf16.msra.mxu0 0
      %1263 = vmatprep.subr.bf16.mxu0 0
      %1264 = vmatpush2.bf16.msra.mxu0 0
      %1265 = vmatprep.subr.bf16.mxu0 0
      %1266 = vmatpush2.bf16.msra.mxu0 0
      %1267 = vmatprep.subr.bf16.mxu0 0
      %1268 = vmatpush2.bf16.msra.mxu0 0
      %1269 = vmatprep.mubr.bf16.mxu0 0
      %1270 = vmatmul.mubr.bf16.gmra.mxu0 %v1112
      %v1271 = vpop.f32.mrf.mxu0
      %v1272 = vadd.f32 %v1231, %v1271
      %v1273 = vpop.f32.mrf.mxu0
      %v1274 = vadd.f32 %v1233, %v1273
      %v1275 = vpop.f32.mrf.mxu0
      %v1276 = vpop.f32.mrf.mxu0
      %1277 = vdwg.mxu0
      %v1278 = vrot.slane %v1272, 4
      %v1279 = vadd.f32 %v1272, %v1278
      %v1280 = vrot.slane %v1279, 2
      %v1281 = vadd.f32 %v1279, %v1280
      %v1282 = vrot.slane %v1281, 1
      %v1283 = vadd.f32 %v1281, %v1282
      %v1284 = vrot.slane %v1274, 4
      %v1285 = vadd.f32 %v1274, %v1284
      %v1286 = vrot.slane %v1285, 2
      %v1287 = vadd.f32 %v1285, %v1286
      %v1288 = vrot.slane %v1287, 1
      %v1289 = vadd.f32 %v1287, %v1288
      %v1290 = vmul.f32 %v1272, %v1272
      %v1291 = vmul.f32 %v1274, %v1274
      %v1292 = vrot.slane %v1290, 4
      %v1293 = vadd.f32 %v1290, %v1292
      %v1294 = vrot.slane %v1293, 2
      %v1295 = vadd.f32 %v1293, %v1294
      %v1296 = vrot.slane %v1295, 1
      %v1297 = vadd.f32 %v1295, %v1296
      %v1298 = vrot.slane %v1291, 4
      %v1299 = vadd.f32 %v1291, %v1298
      %v1300 = vrot.slane %v1299, 2
      %v1301 = vadd.f32 %v1299, %v1300
      %v1302 = vrot.slane %v1301, 1
      %v1303 = vadd.f32 %v1301, %v1302
      %v1304 = vmul.f32 %v1283, 0.125
      %v1305 = vmul.f32 %v1289, 0.125
      %v1306 = vmul.f32 %v1297, 0.125
      %v1307 = vmul.f32 %v1303, 0.125
      %v1308 = vmul.f32 %v1304, %v1304
      %v1309 = vmul.f32 %v1305, %v1305
      %v1310 = vsub.f32 %v1306, %v1308
      %v1311 = vsub.f32 %v1307, %v1309
      %v1312 = vmax.f32 %v1310, 0.0
      %v1313 = vmax.f32 %v1311, 0.0
      %v1314 = vld [vmem:[%s2] sm:$0x3]
      %v1315 = vadd.f32 %v1312, 0.001
      %v1316 = vadd.f32 %v1313, 0.001
      %v1317 = vrsqrt.pop %v1315
      %v1318 = vrsqrt.pop %v1316
      %v1321 = vcombine.low %v1317, %v1318
      %v1323 = vunpack.c.l.s4 1966171168
      %v1324 = vunpack.c.0.s8 %v1323
      %v1325 = vlaneseq
      %v1326 = vshrl.u32 %v1325, 7
      %v1327 = vsub.s32 %v1324, %v1326
      %v1328 = vrot.slane %v1321, %v1327
      %v1330 = vunpack.c.l.s4 1966171168
      %v1331 = vunpack.c.0.s8 %v1330
      %v1332 = vlaneseq
      %v1333 = vshrl.u32 %v1332, 7
      %v1334 = vsub.s32 %v1331, %v1333
      %v1335 = vrot.slane %v1328, %v1334
      %v1337 = vmul.f32 %v1314, %v1335
      %v1338 = vld [vmem:[%s3] sm:$0x3]
      %v1340 = vlaneseq
      %v1341 = vshrl.u32 %v1340, 7
      %v1342 = vsub.s32 0, %v1341
      %v1343 = vrot.slane %v1337, %v1342
      %v1344 = vlaneseq
      %v1345 = vshrl.u32 %v1344, 7
      %v1346 = vsub.s32 1, %v1345
      %v1347 = vrot.slane %v1337, %v1346
      %v1350 = vmul.f32 %v1304, %v1343
      %v1351 = vmul.f32 %v1305, %v1347
      %v1354 = vcombine.low %v1350, %v1351
      %v1356 = vunpack.c.l.s4 1966171168
      %v1357 = vunpack.c.0.s8 %v1356
      %v1358 = vlaneseq
      %v1359 = vshrl.u32 %v1358, 7
      %v1360 = vsub.s32 %v1357, %v1359
      %v1361 = vrot.slane %v1354, %v1360
      %v1363 = vunpack.c.l.s4 1966171168
      %v1364 = vunpack.c.0.s8 %v1363
      %v1365 = vlaneseq
      %v1366 = vshrl.u32 %v1365, 7
      %v1367 = vsub.s32 %v1364, %v1366
      %v1368 = vrot.slane %v1361, %v1367
      %v1370 = vsub.f32 %v1338, %v1368
      %v1371 = vmul.f32 %v1272, %v1343
      %v1372 = vmul.f32 %v1274, %v1347
      %v1374 = vlaneseq
      %v1375 = vshrl.u32 %v1374, 7
      %v1376 = vsub.s32 0, %v1375
      %v1377 = vrot.slane %v1370, %v1376
      %v1378 = vlaneseq
      %v1379 = vshrl.u32 %v1378, 7
      %v1380 = vsub.s32 1, %v1379
      %v1381 = vrot.slane %v1370, %v1380
      %v1384 = vadd.f32 %v1371, %v1377
      %v1385 = vadd.f32 %v1372, %v1381
      %v1386 = vmax.f32 %v1384, 0.0
      %v1387 = vmax.f32 %v1385, 0.0
      %v1388 = vpack.c.bf16 %v1386, %v1386
      %v1389 = vpack.c.bf16 %v1387, %v1387
      %v1390 = vld [vmem:[%s4] sm:$0xf]
      %v1391 = vld [vmem:[%s4 + $0x4] sm:$0xf]
      %v1392 = vld [vmem:[%s4 + $0x8] sm:$0xf]
      %v1393 = vld [vmem:[%s4 + $0xc] sm:$0xf]
      %v1394 = vld [vmem:[%s4 + $0x10] sm:$0xf]
      %v1395 = vld [vmem:[%s4 + $0x14] sm:$0xf]
      %v1396 = vld [vmem:[%s4 + $0x18] sm:$0xf]
      %v1397 = vld [vmem:[%s4 + $0x1c] sm:$0xf]
      %v1398 = vld [vmem:[%s4 + $0x20] sm:$0xf]
      %v1399 = vld [vmem:[%s4 + $0x24] sm:$0xf]
      %v1400 = vld [vmem:[%s4 + $0x28] sm:$0xf]
      %v1401 = vld [vmem:[%s4 + $0x2c] sm:$0xf]
      %v1402 = vld [vmem:[%s4 + $0x30] sm:$0xf]
      %v1403 = vld [vmem:[%s4 + $0x34] sm:$0xf]
      %v1404 = vld [vmem:[%s4 + $0x38] sm:$0xf]
      %v1405 = vld [vmem:[%s4 + $0x3c] sm:$0xf]
      %v1406 = vld [vmem:[%s4 + $0x40] sm:$0xf]
      %v1407 = vld [vmem:[%s4 + $0x44] sm:$0xf]
      %v1408 = vld [vmem:[%s4 + $0x48] sm:$0xf]
      %v1409 = vld [vmem:[%s4 + $0x4c] sm:$0xf]
      %v1410 = vld [vmem:[%s4 + $0x50] sm:$0xf]
      %v1411 = vld [vmem:[%s4 + $0x54] sm:$0xf]
      %v1412 = vld [vmem:[%s4 + $0x58] sm:$0xf]
      %v1413 = vld [vmem:[%s4 + $0x5c] sm:$0xf]
      %v1414 = vld [vmem:[%s4 + $0x60] sm:$0xf]
      %v1415 = vld [vmem:[%s4 + $0x64] sm:$0xf]
      %v1416 = vld [vmem:[%s4 + $0x68] sm:$0xf]
      %v1417 = vld [vmem:[%s4 + $0x6c] sm:$0xf]
      %v1418 = vld [vmem:[%s4 + $0x70] sm:$0xf]
      %v1419 = vld [vmem:[%s4 + $0x74] sm:$0xf]
      %v1420 = vld [vmem:[%s4 + $0x78] sm:$0xf]
      %v1421 = vld [vmem:[%s4 + $0x7c] sm:$0xf]
      %v1454 = vunpack.c.l.b16 %v1390
      %v1455 = vunpack.c.l.b16 %v1391
      %v1456 = vunpack.c.l.b16 %v1392
      %v1457 = vunpack.c.l.b16 %v1393
      %v1458 = vunpack.c.l.b16 %v1394
      %v1459 = vunpack.c.l.b16 %v1395
      %v1460 = vunpack.c.l.b16 %v1396
      %v1461 = vunpack.c.l.b16 %v1397
      %v1462 = vunpack.c.l.b16 %v1398
      %v1463 = vunpack.c.l.b16 %v1399
      %v1464 = vunpack.c.l.b16 %v1400
      %v1465 = vunpack.c.l.b16 %v1401
      %v1466 = vunpack.c.l.b16 %v1402
      %v1467 = vunpack.c.l.b16 %v1403
      %v1468 = vunpack.c.l.b16 %v1404
      %v1469 = vunpack.c.l.b16 %v1405
      %v1470 = vunpack.c.l.b16 %v1406
      %v1471 = vunpack.c.l.b16 %v1407
      %v1472 = vunpack.c.l.b16 %v1408
      %v1473 = vunpack.c.l.b16 %v1409
      %v1474 = vunpack.c.l.b16 %v1410
      %v1475 = vunpack.c.l.b16 %v1411
      %v1476 = vunpack.c.l.b16 %v1412
      %v1477 = vunpack.c.l.b16 %v1413
      %v1478 = vunpack.c.l.b16 %v1414
      %v1479 = vunpack.c.l.b16 %v1415
      %v1480 = vunpack.c.l.b16 %v1416
      %v1481 = vunpack.c.l.b16 %v1417
      %v1482 = vunpack.c.l.b16 %v1418
      %v1483 = vunpack.c.l.b16 %v1419
      %v1484 = vunpack.c.l.b16 %v1420
      %v1485 = vunpack.c.l.b16 %v1421
      %v1486 = vpack.c.b16 %v1455, %v1454
      %v1487 = vpack.c.b16 %v1457, %v1456
      %v1488 = vpack.c.b16 %v1459, %v1458
      %v1489 = vpack.c.b16 %v1461, %v1460
      %v1490 = vpack.c.b16 %v1463, %v1462
      %v1491 = vpack.c.b16 %v1465, %v1464
      %v1492 = vpack.c.b16 %v1467, %v1466
      %v1493 = vpack.c.b16 %v1469, %v1468
      %v1494 = vpack.c.b16 %v1471, %v1470
      %v1495 = vpack.c.b16 %v1473, %v1472
      %v1496 = vpack.c.b16 %v1475, %v1474
      %v1497 = vpack.c.b16 %v1477, %v1476
      %v1498 = vpack.c.b16 %v1479, %v1478
      %v1499 = vpack.c.b16 %v1481, %v1480
      %v1500 = vpack.c.b16 %v1483, %v1482
      %v1501 = vpack.c.b16 %v1485, %v1484
      %1518 = vmatprep.subr.bf16.mxu0 0
      %1519 = vmatpush1.bf16.msra.mxu0 %v1493
      %1520 = vmatprep.subr.bf16.mxu0 0
      %1521 = vmatpush1.bf16.msra.mxu0 %v1492
      %1522 = vmatprep.subr.bf16.mxu0 0
      %1523 = vmatpush1.bf16.msra.mxu0 %v1491
      %1524 = vmatprep.subr.bf16.mxu0 0
      %1525 = vmatpush1.bf16.msra.mxu0 %v1490
      %1526 = vmatprep.subr.bf16.mxu0 0
      %1527 = vmatpush1.bf16.msra.mxu0 %v1489
      %1528 = vmatprep.subr.bf16.mxu0 0
      %1529 = vmatpush1.bf16.msra.mxu0 %v1488
      %1530 = vmatprep.subr.bf16.mxu0 0
      %1531 = vmatpush1.bf16.msra.mxu0 %v1487
      %1532 = vmatprep.subr.bf16.mxu0 0
      %1533 = vmatpush1.bf16.msra.mxu0 %v1486
      %1534 = vmatprep.subr.bf16.mxu0 0
      %1535 = vmatpush2.bf16.msra.mxu0 %v1501
      %1536 = vmatprep.subr.bf16.mxu0 0
      %1537 = vmatpush2.bf16.msra.mxu0 %v1500
      %1538 = vmatprep.subr.bf16.mxu0 0
      %1539 = vmatpush2.bf16.msra.mxu0 %v1499
      %1540 = vmatprep.subr.bf16.mxu0 0
      %1541 = vmatpush2.bf16.msra.mxu0 %v1498
      %1542 = vmatprep.subr.bf16.mxu0 0
      %1543 = vmatpush2.bf16.msra.mxu0 %v1497
      %1544 = vmatprep.subr.bf16.mxu0 0
      %1545 = vmatpush2.bf16.msra.mxu0 %v1496
      %1546 = vmatprep.subr.bf16.mxu0 0
      %1547 = vmatpush2.bf16.msra.mxu0 %v1495
      %1548 = vmatprep.subr.bf16.mxu0 0
      %1549 = vmatpush2.bf16.msra.mxu0 %v1494
      %1550 = vmatprep.mubr.bf16.mxu0 %v1389
      %1551 = vmatmul.mubr.bf16.gmra.mxu0 %v1388
      %v1552 = vpop.f32.mrf.mxu0
      %v1553 = vadd.f32 0.0, %v1552
      %v1554 = vpop.f32.mrf.mxu0
      %v1555 = vpop.f32.mrf.mxu0
      %v1556 = vpop.f32.mrf.mxu0
      %1557 = vdwg.mxu0
      %v1558 = vrot.slane %v1553, 4
      %v1559 = vadd.f32 %v1553, %v1558
      %v1560 = vrot.slane %v1559, 2
      %v1561 = vadd.f32 %v1559, %v1560
      %v1562 = vrot.slane %v1561, 1
      %v1563 = vadd.f32 %v1561, %v1562
      %v1564 = vmul.f32 %v1553, %v1553
      %v1565 = vrot.slane %v1564, 4
      %v1566 = vadd.f32 %v1564, %v1565
      %v1567 = vrot.slane %v1566, 2
      %v1568 = vadd.f32 %v1566, %v1567
      %v1569 = vrot.slane %v1568, 1
      %v1570 = vadd.f32 %v1568, %v1569
      %v1571 = vmul.f32 %v1563, 0.125
      %v1572 = vmul.f32 %v1570, 0.125
      %v1573 = vmul.f32 %v1571, %v1571
      %v1574 = vsub.f32 %v1572, %v1573
      %v1575 = vmax.f32 %v1574, 0.0
      %v1576 = vld [vmem:[%s5] sm:$0x1]
      %v1577 = vadd.f32 %v1575, 0.001
      %v1578 = vrsqrt.pop %v1577
      %v1579 = vmul.f32 %v1576, %v1578
      %v1580 = vld [vmem:[%s6] sm:$0x1]
      %v1581 = vmul.f32 %v1571, %v1579
      %v1582 = vsub.f32 %v1580, %v1581
      %v1584 = vlaneseq
      %v1585 = vshrl.u32 %v1584, 7
      %v1586 = vsub.s32 0, %v1585
      %v1587 = vrot.slane %v1579, %v1586
      %v1589 = vmul.f32 %v1553, %v1587
      %v1591 = vlaneseq
      %v1592 = vshrl.u32 %v1591, 7
      %v1593 = vsub.s32 0, %v1592
      %v1594 = vrot.slane %v1582, %v1593
      %v1596 = vadd.f32 %v1589, %v1594
      %v1597 = vmax.f32 %v1596, 0.0
      %v1598 = vpack.c.bf16 %v1597, %v1597
      %v1599 = vld [vmem:[%s7] sm:$0xf]
      %v1600 = vld [vmem:[%s7 + $0x4] sm:$0xf]
      %v1601 = vld [vmem:[%s7 + $0x8] sm:$0xf]
      %v1602 = vld [vmem:[%s7 + $0xc] sm:$0xf]
      %v1603 = vld [vmem:[%s7 + $0x10] sm:$0xf]
      %v1604 = vld [vmem:[%s7 + $0x14] sm:$0xf]
      %v1605 = vld [vmem:[%s7 + $0x18] sm:$0xf]
      %v1606 = vld [vmem:[%s7 + $0x1c] sm:$0xf]
      %v1607 = vld [vmem:[%s7 + $0x20] sm:$0xf]
      %v1608 = vld [vmem:[%s7 + $0x24] sm:$0xf]
      %v1609 = vld [vmem:[%s7 + $0x28] sm:$0xf]
      %v1610 = vld [vmem:[%s7 + $0x2c] sm:$0xf]
      %v1611 = vld [vmem:[%s7 + $0x30] sm:$0xf]
      %v1612 = vld [vmem:[%s7 + $0x34] sm:$0xf]
      %v1613 = vld [vmem:[%s7 + $0x38] sm:$0xf]
      %v1614 = vld [vmem:[%s7 + $0x3c] sm:$0xf]
      %v1631 = vunpack.c.l.b16 %v1599
      %v1632 = vunpack.c.l.b16 %v1600
      %v1633 = vunpack.c.l.b16 %v1601
      %v1634 = vunpack.c.l.b16 %v1602
      %v1635 = vunpack.c.l.b16 %v1603
      %v1636 = vunpack.c.l.b16 %v1604
      %v1637 = vunpack.c.l.b16 %v1605
      %v1638 = vunpack.c.l.b16 %v1606
      %v1639 = vunpack.c.l.b16 %v1607
      %v1640 = vunpack.c.l.b16 %v1608
      %v1641 = vunpack.c.l.b16 %v1609
      %v1642 = vunpack.c.l.b16 %v1610
      %v1643 = vunpack.c.l.b16 %v1611
      %v1644 = vunpack.c.l.b16 %v1612
      %v1645 = vunpack.c.l.b16 %v1613
      %v1646 = vunpack.c.l.b16 %v1614
      %v1647 = vpack.c.b16 %v1632, %v1631
      %v1648 = vpack.c.b16 %v1634, %v1633
      %v1649 = vpack.c.b16 %v1636, %v1635
      %v1650 = vpack.c.b16 %v1638, %v1637
      %v1651 = vpack.c.b16 %v1640, %v1639
      %v1652 = vpack.c.b16 %v1642, %v1641
      %v1653 = vpack.c.b16 %v1644, %v1643
      %v1654 = vpack.c.b16 %v1646, %v1645
      %1663 = vmatprep.subr.bf16.mxu0 0
      %1664 = vmatpush1.bf16.msra.mxu0 %v1654
      %1665 = vmatprep.subr.bf16.mxu0 0
      %1666 = vmatpush1.bf16.msra.mxu0 %v1653
      %1667 = vmatprep.subr.bf16.mxu0 0
      %1668 = vmatpush1.bf16.msra.mxu0 %v1652
      %1669 = vmatprep.subr.bf16.mxu0 0
      %1670 = vmatpush1.bf16.msra.mxu0 %v1651
      %1671 = vmatprep.subr.bf16.mxu0 0
      %1672 = vmatpush1.bf16.msra.mxu0 %v1650
      %1673 = vmatprep.subr.bf16.mxu0 0
      %1674 = vmatpush1.bf16.msra.mxu0 %v1649
      %1675 = vmatprep.subr.bf16.mxu0 0
      %1676 = vmatpush1.bf16.msra.mxu0 %v1648
      %1677 = vmatprep.subr.bf16.mxu0 0
      %1678 = vmatpush1.bf16.msra.mxu0 %v1647
      %1679 = vmatprep.subr.bf16.mxu0 0
      %1680 = vmatpush2.bf16.msra.mxu0 0
      %1681 = vmatprep.subr.bf16.mxu0 0
      %1682 = vmatpush2.bf16.msra.mxu0 0
      %1683 = vmatprep.subr.bf16.mxu0 0
      %1684 = vmatpush2.bf16.msra.mxu0 0
      %1685 = vmatprep.subr.bf16.mxu0 0
      %1686 = vmatpush2.bf16.msra.mxu0 0
      %1687 = vmatprep.subr.bf16.mxu0 0
      %1688 = vmatpush2.bf16.msra.mxu0 0
      %1689 = vmatprep.subr.bf16.mxu0 0
      %1690 = vmatpush2.bf16.msra.mxu0 0
      %1691 = vmatprep.subr.bf16.mxu0 0
      %1692 = vmatpush2.bf16.msra.mxu0 0
      %1693 = vmatprep.subr.bf16.mxu0 0
      %1694 = vmatpush2.bf16.msra.mxu0 0
      %1695 = vmatprep.mubr.bf16.mxu0 0
      %1696 = vmatmul.mubr.bf16.gmra.mxu0 %v1598
      %v1697 = vpop.f32.mrf.mxu0
      %v1698 = vadd.f32 0.0, %v1697
      %v1699 = vpop.f32.mrf.mxu0
      %v1700 = vpop.f32.mrf.mxu0
      %v1701 = vpop.f32.mrf.mxu0
      %1702 = vdwg.mxu0
      %v1703 = vrot.slane %v1698, 4
      %v1704 = vadd.f32 %v1698, %v1703
      %v1705 = vrot.slane %v1704, 2
      %v1706 = vadd.f32 %v1704, %v1705
      %v1707 = vrot.slane %v1706, 1
      %v1708 = vadd.f32 %v1706, %v1707
      %v1709 = vmul.f32 %v1698, %v1698
      %v1710 = vrot.slane %v1709, 4
      %v1711 = vadd.f32 %v1709, %v1710
      %v1712 = vrot.slane %v1711, 2
      %v1713 = vadd.f32 %v1711, %v1712
      %v1714 = vrot.slane %v1713, 1
      %v1715 = vadd.f32 %v1713, %v1714
      %v1716 = vmul.f32 %v1708, 0.125
      %v1717 = vmul.f32 %v1715, 0.125
      %v1718 = vmul.f32 %v1716, %v1716
      %v1719 = vsub.f32 %v1717, %v1718
      %v1720 = vmax.f32 %v1719, 0.0
      %v1721 = vld [vmem:[%s8] sm:$0x1]
      %v1722 = vadd.f32 %v1720, 0.001
      %v1723 = vrsqrt.pop %v1722
      %v1724 = vmul.f32 %v1721, %v1723
      %v1725 = vld [vmem:[%s9] sm:$0x1]
      %v1726 = vmul.f32 %v1716, %v1724
      %v1727 = vsub.f32 %v1725, %v1726
      %v1729 = vlaneseq
      %v1730 = vshrl.u32 %v1729, 7
      %v1731 = vsub.s32 0, %v1730
      %v1732 = vrot.slane %v1724, %v1731
      %v1734 = vmul.f32 %v1698, %v1732
      %v1736 = vlaneseq
      %v1737 = vshrl.u32 %v1736, 7
      %v1738 = vsub.s32 0, %v1737
      %v1739 = vrot.slane %v1727, %v1738
      %v1741 = vadd.f32 %v1734, %v1739
      %v1742 = vmax.f32 %v1741, 0.0
      %v1743 = vpack.c.bf16 %v1742, %v1742
      %v1744 = vld [vmem:[%s10] sm:$0xf]
      %v1745 = vld [vmem:[%s10 + $0x4] sm:$0xf]
      %v1746 = vld [vmem:[%s10 + $0x8] sm:$0xf]
      %v1747 = vld [vmem:[%s10 + $0xc] sm:$0xf]
      %v1748 = vld [vmem:[%s10 + $0x10] sm:$0xf]
      %v1749 = vld [vmem:[%s10 + $0x14] sm:$0xf]
      %v1750 = vld [vmem:[%s10 + $0x18] sm:$0xf]
      %v1751 = vld [vmem:[%s10 + $0x1c] sm:$0xf]
      %v1752 = vld [vmem:[%s10 + $0x20] sm:$0xf]
      %v1753 = vld [vmem:[%s10 + $0x24] sm:$0xf]
      %v1754 = vld [vmem:[%s10 + $0x28] sm:$0xf]
      %v1755 = vld [vmem:[%s10 + $0x2c] sm:$0xf]
      %v1756 = vld [vmem:[%s10 + $0x30] sm:$0xf]
      %v1757 = vld [vmem:[%s10 + $0x34] sm:$0xf]
      %v1758 = vld [vmem:[%s10 + $0x38] sm:$0xf]
      %v1759 = vld [vmem:[%s10 + $0x3c] sm:$0xf]
      %v1776 = vunpack.c.l.b16 %v1744
      %v1777 = vunpack.c.l.b16 %v1745
      %v1778 = vunpack.c.l.b16 %v1746
      %v1779 = vunpack.c.l.b16 %v1747
      %v1780 = vunpack.c.l.b16 %v1748
      %v1781 = vunpack.c.l.b16 %v1749
      %v1782 = vunpack.c.l.b16 %v1750
      %v1783 = vunpack.c.l.b16 %v1751
      %v1784 = vunpack.c.l.b16 %v1752
      %v1785 = vunpack.c.l.b16 %v1753
      %v1786 = vunpack.c.l.b16 %v1754
      %v1787 = vunpack.c.l.b16 %v1755
      %v1788 = vunpack.c.l.b16 %v1756
      %v1789 = vunpack.c.l.b16 %v1757
      %v1790 = vunpack.c.l.b16 %v1758
      %v1791 = vunpack.c.l.b16 %v1759
      %v1792 = vpack.c.b16 %v1777, %v1776
      %v1793 = vpack.c.b16 %v1779, %v1778
      %v1794 = vpack.c.b16 %v1781, %v1780
      %v1795 = vpack.c.b16 %v1783, %v1782
      %v1796 = vpack.c.b16 %v1785, %v1784
      %v1797 = vpack.c.b16 %v1787, %v1786
      %v1798 = vpack.c.b16 %v1789, %v1788
      %v1799 = vpack.c.b16 %v1791, %v1790
      %1808 = vmatprep.subr.bf16.mxu0 0
      %1809 = vmatpush1.bf16.msra.mxu0 %v1799
      %1810 = vmatprep.subr.bf16.mxu0 0
      %1811 = vmatpush1.bf16.msra.mxu0 %v1798
      %1812 = vmatprep.subr.bf16.mxu0 0
      %1813 = vmatpush1.bf16.msra.mxu0 %v1797
      %1814 = vmatprep.subr.bf16.mxu0 0
      %1815 = vmatpush1.bf16.msra.mxu0 %v1796
      %1816 = vmatprep.subr.bf16.mxu0 0
      %1817 = vmatpush1.bf16.msra.mxu0 %v1795
      %1818 = vmatprep.subr.bf16.mxu0 0
      %1819 = vmatpush1.bf16.msra.mxu0 %v1794
      %1820 = vmatprep.subr.bf16.mxu0 0
      %1821 = vmatpush1.bf16.msra.mxu0 %v1793
      %1822 = vmatprep.subr.bf16.mxu0 0
      %1823 = vmatpush1.bf16.msra.mxu0 %v1792
      %1824 = vmatprep.subr.bf16.mxu0 0
      %1825 = vmatpush2.bf16.msra.mxu0 0
      %1826 = vmatprep.subr.bf16.mxu0 0
      %1827 = vmatpush2.bf16.msra.mxu0 0
      %1828 = vmatprep.subr.bf16.mxu0 0
      %1829 = vmatpush2.bf16.msra.mxu0 0
      %1830 = vmatprep.subr.bf16.mxu0 0
      %1831 = vmatpush2.bf16.msra.mxu0 0
      %1832 = vmatprep.subr.bf16.mxu0 0
      %1833 = vmatpush2.bf16.msra.mxu0 0
      %1834 = vmatprep.subr.bf16.mxu0 0
      %1835 = vmatpush2.bf16.msra.mxu0 0
      %1836 = vmatprep.subr.bf16.mxu0 0
      %1837 = vmatpush2.bf16.msra.mxu0 0
      %1838 = vmatprep.subr.bf16.mxu0 0
      %1839 = vmatpush2.bf16.msra.mxu0 0
      %1840 = vmatprep.mubr.bf16.mxu0 0
      %1841 = vmatmul.mubr.bf16.gmra.mxu0 %v1743
      %v1842 = vpop.f32.mrf.mxu0
      %v1843 = vadd.f32 0.0, %v1842
      %v1844 = vpop.f32.mrf.mxu0
      %v1845 = vpop.f32.mrf.mxu0
      %v1846 = vpop.f32.mrf.mxu0
      %1847 = vdwg.mxu0
      %v1848 = vrot.slane %v1843, 4
      %v1849 = vadd.f32 %v1843, %v1848
      %v1850 = vrot.slane %v1849, 2
      %v1851 = vadd.f32 %v1849, %v1850
      %v1852 = vrot.slane %v1851, 1
      %v1853 = vadd.f32 %v1851, %v1852
      %v1854 = vmul.f32 %v1843, %v1843
      %v1855 = vrot.slane %v1854, 4
      %v1856 = vadd.f32 %v1854, %v1855
      %v1857 = vrot.slane %v1856, 2
      %v1858 = vadd.f32 %v1856, %v1857
      %v1859 = vrot.slane %v1858, 1
      %v1860 = vadd.f32 %v1858, %v1859
      %v1861 = vmul.f32 %v1853, 0.125
      %v1862 = vmul.f32 %v1860, 0.125
      %v1863 = vmul.f32 %v1861, %v1861
      %v1864 = vsub.f32 %v1862, %v1863
      %v1865 = vmax.f32 %v1864, 0.0
      %v1866 = vld [vmem:[%s11] sm:$0x1]
      %v1867 = vadd.f32 %v1865, 0.001
      %v1868 = vrsqrt.pop %v1867
      %v1869 = vmul.f32 %v1866, %v1868
      %v1870 = vld [vmem:[%s12] sm:$0x1]
      %v1871 = vmul.f32 %v1861, %v1869
      %v1872 = vsub.f32 %v1870, %v1871
      %v1874 = vlaneseq
      %v1875 = vshrl.u32 %v1874, 7
      %v1876 = vsub.s32 0, %v1875
      %v1877 = vrot.slane %v1869, %v1876
      %v1879 = vmul.f32 %v1843, %v1877
      %v1881 = vlaneseq
      %v1882 = vshrl.u32 %v1881, 7
      %v1883 = vsub.s32 0, %v1882
      %v1884 = vrot.slane %v1872, %v1883
      %v1886 = vadd.f32 %v1879, %v1884
      %v1887 = vmax.f32 %v1886, 0.0
      %v1888 = vpack.c.bf16 %v1887, %v1887
      %v1889 = vld [vmem:[%s13] sm:$0xf]
      %v1890 = vld [vmem:[%s13 + $0x4] sm:$0xf]
      %v1891 = vld [vmem:[%s13 + $0x8] sm:$0xf]
      %v1892 = vld [vmem:[%s13 + $0xc] sm:$0xf]
      %v1893 = vld [vmem:[%s13 + $0x10] sm:$0xf]
      %v1894 = vld [vmem:[%s13 + $0x14] sm:$0xf]
      %v1895 = vld [vmem:[%s13 + $0x18] sm:$0xf]
      %v1896 = vld [vmem:[%s13 + $0x1c] sm:$0xf]
      %v1897 = vld [vmem:[%s13 + $0x20] sm:$0xf]
      %v1898 = vld [vmem:[%s13 + $0x24] sm:$0xf]
      %v1899 = vld [vmem:[%s13 + $0x28] sm:$0xf]
      %v1900 = vld [vmem:[%s13 + $0x2c] sm:$0xf]
      %v1901 = vld [vmem:[%s13 + $0x30] sm:$0xf]
      %v1902 = vld [vmem:[%s13 + $0x34] sm:$0xf]
      %v1903 = vld [vmem:[%s13 + $0x38] sm:$0xf]
      %v1904 = vld [vmem:[%s13 + $0x3c] sm:$0xf]
      %v1905 = vld [vmem:[%s14] sm:$0x1]
      %v1907 = vlaneseq
      %v1908 = vshrl.u32 %v1907, 7
      %v1909 = vsub.s32 0, %v1908
      %v1910 = vrot.slane %v1905, %v1909
      %v1928 = vunpack.c.l.b16 %v1889
      %v1929 = vunpack.c.l.b16 %v1890
      %v1930 = vunpack.c.l.b16 %v1891
      %v1931 = vunpack.c.l.b16 %v1892
      %v1932 = vunpack.c.l.b16 %v1893
      %v1933 = vunpack.c.l.b16 %v1894
      %v1934 = vunpack.c.l.b16 %v1895
      %v1935 = vunpack.c.l.b16 %v1896
      %v1936 = vunpack.c.l.b16 %v1897
      %v1937 = vunpack.c.l.b16 %v1898
      %v1938 = vunpack.c.l.b16 %v1899
      %v1939 = vunpack.c.l.b16 %v1900
      %v1940 = vunpack.c.l.b16 %v1901
      %v1941 = vunpack.c.l.b16 %v1902
      %v1942 = vunpack.c.l.b16 %v1903
      %v1943 = vunpack.c.l.b16 %v1904
      %v1944 = vpack.c.b16 %v1929, %v1928
      %v1945 = vpack.c.b16 %v1931, %v1930
      %v1946 = vpack.c.b16 %v1933, %v1932
      %v1947 = vpack.c.b16 %v1935, %v1934
      %v1948 = vpack.c.b16 %v1937, %v1936
      %v1949 = vpack.c.b16 %v1939, %v1938
      %v1950 = vpack.c.b16 %v1941, %v1940
      %v1951 = vpack.c.b16 %v1943, %v1942
      %1960 = vmatprep.subr.bf16.mxu0 0
      %1961 = vmatpush1.bf16.msra.mxu0 %v1951
      %1962 = vmatprep.subr.bf16.mxu0 0
      %1963 = vmatpush1.bf16.msra.mxu0 %v1950
      %1964 = vmatprep.subr.bf16.mxu0 0
      %1965 = vmatpush1.bf16.msra.mxu0 %v1949
      %1966 = vmatprep.subr.bf16.mxu0 0
      %1967 = vmatpush1.bf16.msra.mxu0 %v1948
      %1968 = vmatprep.subr.bf16.mxu0 0
      %1969 = vmatpush1.bf16.msra.mxu0 %v1947
      %1970 = vmatprep.subr.bf16.mxu0 0
      %1971 = vmatpush1.bf16.msra.mxu0 %v1946
      %1972 = vmatprep.subr.bf16.mxu0 0
      %1973 = vmatpush1.bf16.msra.mxu0 %v1945
      %1974 = vmatprep.subr.bf16.mxu0 0
      %1975 = vmatpush1.bf16.msra.mxu0 %v1944
      %1976 = vmatprep.subr.bf16.mxu0 0
      %1977 = vmatpush2.bf16.msra.mxu0 0
      %1978 = vmatprep.subr.bf16.mxu0 0
      %1979 = vmatpush2.bf16.msra.mxu0 0
      %1980 = vmatprep.subr.bf16.mxu0 0
      %1981 = vmatpush2.bf16.msra.mxu0 0
      %1982 = vmatprep.subr.bf16.mxu0 0
      %1983 = vmatpush2.bf16.msra.mxu0 0
      %1984 = vmatprep.subr.bf16.mxu0 0
      %1985 = vmatpush2.bf16.msra.mxu0 0
      %1986 = vmatprep.subr.bf16.mxu0 0
      %1987 = vmatpush2.bf16.msra.mxu0 0
      %1988 = vmatprep.subr.bf16.mxu0 0
      %1989 = vmatpush2.bf16.msra.mxu0 0
      %1990 = vmatprep.subr.bf16.mxu0 0
      %1991 = vmatpush2.bf16.msra.mxu0 0
      %1992 = vmatprep.mubr.bf16.mxu0 0
      %1993 = vmatmul.mubr.bf16.gmra.mxu0 %v1888
      %v1994 = vpop.f32.mrf.mxu0
      %v1995 = vadd.f32 %v1910, %v1994
      %v1996 = vpop.f32.mrf.mxu0
      %v1997 = vpop.f32.mrf.mxu0
      %v1998 = vpop.f32.mrf.mxu0
      %1999 = vdwg.mxu0
      %2000 = vst [vmem:[%s492] sm:$0xff] %v1995
      %p2001 = scmp.lt.s32.totalorder %s26, 3
      %s2002 = scalar_select %p2001, %s26, 3
      %s2003 = smul.addr %s2002, 8
      %s2004 = scalar_lea.vmem %s15, %s2003
      // Predicated region
      $region81: #{_forward_prepared.1} parent=79 // pred_check
        %p2005 = pneg %p364
      $region82: #{_forward_prepared.1} parent=79 // pred_check_branch
        %2007 = sbr.rel (%p2005) target = $region84
      $region83: #{_forward_prepared.1} parent=79 // pred_region
        _
      $region84: #{_forward_prepared.1} parent=79 // pred_fallthru
        _
    $region80: #{_forward_prepared.1} parent=5 // pred_fallthru
      _
    %p2008 = scmp.le.s32.totalorder 2, %s21
    // Predicated region
    $region85: #{_forward_prepared.1} parent=5 // pred_check
      %p2009 = pneg %p2008
    $region86: #{_forward_prepared.1} parent=5 // pred_check_branch
      %2011 = sbr.rel (%p2009) target = $region88
    $region87: #{_forward_prepared.1} parent=5 // pred_region
      %s2012 = ssub.s32 %s21, 2
      // Predicated region
      $region89: #{_forward_prepared.1} parent=87 // pred_check
        %p2013 = pneg %p370
      $region90: #{_forward_prepared.1} parent=87 // pred_check_branch
        %2015 = sbr.rel (%p2013) target = $region92
      $region91: #{_forward_prepared.1} parent=87 // pred_region
        %p2016 = scmp.lt.s32.totalorder %s27, 3
        %s2017 = scalar_select %p2016, %s27, 3
        %s2018 = smul.addr %s2017, 8
        %s2019 = scalar_lea.vmem %s15, %s2018
      $region92: #{_forward_prepared.1} parent=87 // pred_fallthru
        _
    $region88: #{_forward_prepared.1} parent=5 // pred_fallthru
      _
  $region6: #{_forward_prepared.1} parent=0 // loop_footer
    %s25 = sadd.s32 1, %s21
  $region7: #{_forward_prepared.1} parent=0 // loop_footer_branch
    %20 = sbr.rel target = $region3
  $region8: #{_forward_prepared.1} parent=0 // loop_exit
    _

</llo_original>
